<compile_context>
chip_gen: v7x
topology: tpu7x:2x2x1
jax: 0.10.0
libtpu: 0.0.40
codegen_flags: <defaults>
</compile_context>

<pallas_src>
import functools

import jax
import jax.numpy as jnp
from jax import lax
from jax.experimental import pallas as pl
from jax.experimental.pallas import tpu as pltpu


# ----------------------------- Pallas kernel ------------------------------- #

def _resnet_block_kernel(x_ref, yy_ref, xx_ref, w1_ref, shift1_ref, w2_ref,
                         b2_ref, o_ref, patch_ref, *, H, W, C, k, d1, d2):
    """Fused conv1+BN+ReLU -> conv2+bias+residual for one image (channel-major).

    x_ref      : (C, H*W)       input image, flattened NCHW (lane-dense)
    yy_ref     : (1, H*W) int32 row index of each flattened position
    xx_ref     : (1, H*W) int32 column index of each flattened position
    w1_ref     : (C, k*k*C)     conv1 weights with the BN scale folded in
    shift1_ref : (C, 1)         folded BN shift (includes conv1 bias)
    w2_ref     : (C, k*k*C)     conv2 weights
    b2_ref     : (C, 1)         conv2 bias
    o_ref      : (C, H*W)       output (flattened NCHW)
    patch_ref  : (k*k*C, H*W)   VMEM scratch: stacked shifted views (im2col rows)
    """
    HW = H * W
    c0 = (k - 1) // 2

    x = x_ref[...]                       # (C, HW) f32, reused for the residual
    yy = yy_ref[...]                     # (1, HW) i32
    xx = xx_ref[...]                     # (1, HW) i32

    def fill_patches(src, d):
        # patch_ref[t*C:(t+1)*C, :] = src shifted by dilated tap t, zeroed outside
        # the image ('same' zero padding).  Shifts are lane rolls (XLU) + masks;
        # the k*k-expanded patch matrix never leaves VMEM and the scratch is fully
        # overwritten each call (no zero fill needed).
        for t in range(k * k):
            ky, kx = t // k, t % k
            dy, dx = (ky - c0) * d, (kx - c0) * d
            if dy == 0 and dx == 0:
                shifted = src
            else:
                off = dy * W + dx                      # flat offset of this tap
                rolled = pltpu.roll(src, shift=(-off) % HW, axis=1)
                valid = ((yy + dy >= 0) & (yy + dy < H) &
                         (xx + dx >= 0) & (xx + dx < W))
                shifted = rolled * valid.astype(jnp.float32)
            patch_ref[t * C:(t + 1) * C, :] = shifted

    # conv1 (dilated 'same', BN scale pre-folded into w1) as ONE K=k*k*C MXU matmul,
    # then folded BN shift + ReLU (LeakyReLU(0.0) == ReLU).
    fill_patches(x, d1)
    y1 = jnp.maximum(
        jnp.dot(w1_ref[...], patch_ref[...], preferred_element_type=jnp.float32)
        + shift1_ref[...], 0.0)

    # conv2 (dilated 'same') + bias + residual; y1 stays register-resident and the
    # patch scratch is reused.
    fill_patches(y1, d2)
    o_ref[...] = (
        jnp.dot(w2_ref[...], patch_ref[...], preferred_element_type=jnp.float32)
        + b2_ref[...] + x)


# ------------------------------- JAX wrapper -------------------------------- #

def init_params(key, in_channels, kernel_size):
    """Deterministic param init. Conv weights stored as (K, K, Cin, Cout) (HWIO)."""
    c, k = in_channels, kernel_size
    ks = jax.random.split(key, 6)
    p = dict(
        w1=0.1 * jax.random.normal(ks[0], (k, k, c, c), jnp.float32),
        b1=0.1 * jax.random.normal(ks[1], (c,), jnp.float32),
        gamma=1.0 + 0.1 * jax.random.normal(ks[2], (c,), jnp.float32),
        beta=0.1 * jax.random.normal(ks[3], (c,), jnp.float32),
        running_mean=0.1 * jax.random.normal(ks[4], (c,), jnp.float32),
        running_var=jnp.abs(1.0 + 0.1 * jax.random.normal(ks[5], (c,), jnp.float32)),
        w2=0.1 * jax.random.normal(jax.random.fold_in(key, 7), (k, k, c, c), jnp.float32),
        b2=0.1 * jax.random.normal(jax.random.fold_in(key, 8), (c,), jnp.float32),
    )
    return p


@functools.partial(jax.jit, static_argnames=("kernel_size", "dilation"))
def resnet_block_bn(x_nchw, params, *, kernel_size, dilation):
    """Forward pass of ResnetBlockBn: stem(x) + x.  Input / output are NCHW."""
    n, c, h, w = x_nchw.shape
    k = kernel_size
    d1, d2 = dilation
    eps = 1e-5
    hw = h * w

    # Flattened NCHW is already channel-major (C, H*W): no transpose, no halo pad.
    x_flat = x_nchw.reshape(n, c, hw)

    # Fold conv1 bias + BatchNorm(eval) into a per-channel scale (folded into the
    # conv1 weights) and a shift added inside the kernel.
    inv_std = 1.0 / jnp.sqrt(params["running_var"] + eps)
    scale = params["gamma"] * inv_std                                        # (C,)
    shift = params["beta"] + scale * (params["b1"] - params["running_mean"])  # (C,)

    # (kH, kW, Cin, Cout) -> (Cout, kH*kW*Cin): columns are tap-major, Cin-minor,
    # matching the patch-row ordering built inside the kernel.
    w1_2d = jnp.transpose(params["w1"], (3, 0, 1, 2)).reshape(c, k * k * c)
    w2_2d = jnp.transpose(params["w2"], (3, 0, 1, 2)).reshape(c, k * k * c)
    w1_2d = w1_2d * scale[:, None]                    # BN scale folded into conv1

    # Row / column index of every flattened spatial position (for boundary masks);
    # avoids in-kernel integer div/mod.
    yy = jnp.repeat(jnp.arange(h, dtype=jnp.int32), w)[None, :]              # (1, HW)
    xx = jnp.tile(jnp.arange(w, dtype=jnp.int32), h)[None, :]                # (1, HW)

    kernel = functools.partial(_resnet_block_kernel, H=h, W=w, C=c, k=k,
                               d1=d1, d2=d2)

    flops = 2 * 2 * n * c * (k * k * c) * hw                       # two convs
    bytes_accessed = 4 * (2 * n * c * hw + 2 * c * k * k * c + 2 * hw + 2 * c)

    # NOTE: weight / shift / bias / index blocks are constant across the grid
    # (index_map -> 0), so they are fetched once and stay VMEM-resident.
    out_flat = pl.pallas_call(
        kernel,
        out_shape=jax.ShapeDtypeStruct((n, c, hw), jnp.float32),
        grid=(n,),
        in_specs=[
            pl.BlockSpec((None, c, hw), lambda i: (i, 0, 0)),      # x (per image)
            pl.BlockSpec((1, hw), lambda i: (0, 0)),               # yy (constant)
            pl.BlockSpec((1, hw), lambda i: (0, 0)),               # xx (constant)
            pl.BlockSpec((c, k * k * c), lambda i: (0, 0)),        # w1 * BN scale
            pl.BlockSpec((c, 1), lambda i: (0, 0)),                # BN shift (+b1)
            pl.BlockSpec((c, k * k * c), lambda i: (0, 0)),        # w2
            pl.BlockSpec((c, 1), lambda i: (0, 0)),                # b2
        ],
        out_specs=pl.BlockSpec((None, c, hw), lambda i: (i, 0, 0)),
        scratch_shapes=[pltpu.VMEM((k * k * c, hw), jnp.float32)],
        compiler_params=pltpu.CompilerParams(dimension_semantics=("parallel",)),
        cost_estimate=pl.CostEstimate(flops=flops, transcendentals=0,
                                      bytes_accessed=bytes_accessed),
    )(x_flat, yy, xx, w1_2d, shift.reshape(c, 1), w2_2d, params["b2"].reshape(c, 1))

    return out_flat.reshape(n, c, h, w)


# --------------------------- pure-JAX reference ----------------------------- #

def _reference(x_nchw, params, kernel_size, dilation):
    k = kernel_size
    eps = 1e-5
    x = jnp.transpose(x_nchw, (0, 2, 3, 1))

    def conv(inp, w_hwio, b, d):
        pad = (k - 1) // 2 * d
        y = lax.conv_general_dilated(
            inp, w_hwio, window_strides=(1, 1),
            padding=((pad, pad), (pad, pad)),
            rhs_dilation=(d, d),
            dimension_numbers=("NHWC", "HWIO", "NHWC"))
        return y + b

    y1 = conv(x, params["w1"], params["b1"], dilation[0])
    y1 = (y1 - params["running_mean"]) / jnp.sqrt(params["running_var"] + eps)
    y1 = y1 * params["gamma"] + params["beta"]
    y1 = jnp.maximum(y1, 0.0)
    y2 = conv(y1, params["w2"], params["b2"], dilation[1])
    out = y2 + x
    return jnp.transpose(out, (0, 3, 1, 2))


# ---------------------------------- main ------------------------------------ #

if __name__ == "__main__":
    key = jax.random.PRNGKey(0)
    in_channels, kernel_size, dilation = 4, 3, (1, 2)
    x = jax.random.normal(jax.random.fold_in(key, 123), (2, in_channels, 16, 16),
                          jnp.float32)
    params = init_params(key, in_channels, kernel_size)

    out = resnet_block_bn(x, params, kernel_size=kernel_size, dilation=dilation)
    out = jax.block_until_ready(out)

    ref = jax.block_until_ready(_reference(x, params, kernel_size, dilation))
    assert out.shape == x.shape and out.dtype == jnp.float32
    assert jnp.allclose(out, ref, atol=1e-4, rtol=1e-4), "mismatch vs reference"

    print("KERNEL_OK")
</pallas_src>

<mosaic_0001>
module attributes {stable_mosaic.version = 11 : i64} {
  func.func @_resnet_block_kernel(%arg0: i32, %arg1: memref<1x4x256xf32, #tpu.memory_space<vmem>>, %arg2: memref<1x256xi32, #tpu.memory_space<vmem>>, %arg3: memref<1x256xi32, #tpu.memory_space<vmem>>, %arg4: memref<4x36xf32, #tpu.memory_space<vmem>>, %arg5: memref<4x1xf32, #tpu.memory_space<vmem>>, %arg6: memref<4x36xf32, #tpu.memory_space<vmem>>, %arg7: memref<4x1xf32, #tpu.memory_space<vmem>>, %arg8: memref<1x4x256xf32, #tpu.memory_space<vmem>>, %arg9: memref<36x256xf32, #tpu.memory_space<vmem>>) attributes {dimension_semantics = [#tpu.dimension_semantics<parallel>], iteration_bounds = array<i64: 2>, scalar_prefetch = 0 : i64, scratch_operands = 1 : i64, tpu.core_type = #tpu.core_type<tc>, window_params = [{transform_indices = @transform_0, window_bounds = array<i64: 1, 4, 256>}, {pipeline_mode = #tpu.pipeline_mode<synchronous>, transform_indices = @transform_1, window_bounds = array<i64: 1, 256>}, {pipeline_mode = #tpu.pipeline_mode<synchronous>, transform_indices = @transform_2, window_bounds = array<i64: 1, 256>}, {pipeline_mode = #tpu.pipeline_mode<synchronous>, transform_indices = @transform_3, window_bounds = array<i64: 4, 36>}, {pipeline_mode = #tpu.pipeline_mode<synchronous>, transform_indices = @transform_4, window_bounds = array<i64: 4, 1>}, {pipeline_mode = #tpu.pipeline_mode<synchronous>, transform_indices = @transform_5, window_bounds = array<i64: 4, 36>}, {pipeline_mode = #tpu.pipeline_mode<synchronous>, transform_indices = @transform_6, window_bounds = array<i64: 4, 1>}, {transform_indices = @transform_7, window_bounds = array<i64: 1, 4, 256>}]} {
    %c0 = arith.constant 0 : index
    %c0_0 = arith.constant 0 : index
    %c0_1 = arith.constant 0 : index
    %0 = vector.load %arg1[%c0, %c0_0, %c0_1] : memref<1x4x256xf32, #tpu.memory_space<vmem>>, vector<1x4x256xf32>
    %1 = vector.shape_cast %0 : vector<1x4x256xf32> to vector<4x256xf32>
    %c0_2 = arith.constant 0 : index
    %c0_3 = arith.constant 0 : index
    %2 = vector.load %arg2[%c0_2, %c0_3] : memref<1x256xi32, #tpu.memory_space<vmem>>, vector<1x256xi32>
    %c0_4 = arith.constant 0 : index
    %c0_5 = arith.constant 0 : index
    %3 = vector.load %arg3[%c0_4, %c0_5] : memref<1x256xi32, #tpu.memory_space<vmem>>, vector<1x256xi32>
    %c17_i32 = arith.constant 17 : i32
    %4 = tpu.dynamic_rotate %1 by %c17_i32 dim 1 : vector<4x256xf32>, i32 -> vector<4x256xf32>
    %c-1_i32 = arith.constant -1 : i32
    %5 = vector.broadcast %c-1_i32 : i32 to vector<1x256xi32>
    %6 = arith.addi %2, %5 : vector<1x256xi32>
    %c0_i32 = arith.constant 0 : i32
    %7 = vector.broadcast %c0_i32 : i32 to vector<1x256xi32>
    %8 = arith.cmpi sge, %6, %7 : vector<1x256xi32>
    %c-1_i32_6 = arith.constant -1 : i32
    %9 = vector.broadcast %c-1_i32_6 : i32 to vector<1x256xi32>
    %10 = arith.addi %2, %9 : vector<1x256xi32>
    %c16_i32 = arith.constant 16 : i32
    %11 = vector.broadcast %c16_i32 : i32 to vector<1x256xi32>
    %12 = arith.cmpi slt, %10, %11 : vector<1x256xi32>
    %13 = arith.andi %8, %12 : vector<1x256xi1>
    %c-1_i32_7 = arith.constant -1 : i32
    %14 = vector.broadcast %c-1_i32_7 : i32 to vector<1x256xi32>
    %15 = arith.addi %3, %14 : vector<1x256xi32>
    %c0_i32_8 = arith.constant 0 : i32
    %16 = vector.broadcast %c0_i32_8 : i32 to vector<1x256xi32>
    %17 = arith.cmpi sge, %15, %16 : vector<1x256xi32>
    %18 = arith.andi %13, %17 : vector<1x256xi1>
    %c-1_i32_9 = arith.constant -1 : i32
    %19 = vector.broadcast %c-1_i32_9 : i32 to vector<1x256xi32>
    %20 = arith.addi %3, %19 : vector<1x256xi32>
    %c16_i32_10 = arith.constant 16 : i32
    %21 = vector.broadcast %c16_i32_10 : i32 to vector<1x256xi32>
    %22 = arith.cmpi slt, %20, %21 : vector<1x256xi32>
    %23 = arith.andi %18, %22 : vector<1x256xi1>
    %24 = arith.extui %23 : vector<1x256xi1> to vector<1x256xi32>
    %25 = arith.sitofp %24 : vector<1x256xi32> to vector<1x256xf32>
    %26 = vector.broadcast %25 : vector<1x256xf32> to vector<4x256xf32>
    %27 = arith.mulf %4, %26 : vector<4x256xf32>
    %c0_11 = arith.constant 0 : index
    %c0_12 = arith.constant 0 : index
    %28 = vector.load %arg9[%c0_11, %c0_12] : memref<36x256xf32, #tpu.memory_space<vmem>>, vector<4x256xf32>
    tpu.vector_store %arg9[%c0_11, %c0_12], %27 {strides = array<i32>} : memref<36x256xf32, #tpu.memory_space<vmem>>, vector<4x256xf32>,
    %c16_i32_13 = arith.constant 16 : i32
    %29 = tpu.dynamic_rotate %1 by %c16_i32_13 dim 1 : vector<4x256xf32>, i32 -> vector<4x256xf32>
    %c-1_i32_14 = arith.constant -1 : i32
    %30 = vector.broadcast %c-1_i32_14 : i32 to vector<1x256xi32>
    %31 = arith.addi %2, %30 : vector<1x256xi32>
    %c0_i32_15 = arith.constant 0 : i32
    %32 = vector.broadcast %c0_i32_15 : i32 to vector<1x256xi32>
    %33 = arith.cmpi sge, %31, %32 : vector<1x256xi32>
    %c-1_i32_16 = arith.constant -1 : i32
    %34 = vector.broadcast %c-1_i32_16 : i32 to vector<1x256xi32>
    %35 = arith.addi %2, %34 : vector<1x256xi32>
    %c16_i32_17 = arith.constant 16 : i32
    %36 = vector.broadcast %c16_i32_17 : i32 to vector<1x256xi32>
    %37 = arith.cmpi slt, %35, %36 : vector<1x256xi32>
    %38 = arith.andi %33, %37 : vector<1x256xi1>
    %c0_i32_18 = arith.constant 0 : i32
    %39 = vector.broadcast %c0_i32_18 : i32 to vector<1x256xi32>
    %40 = arith.addi %3, %39 : vector<1x256xi32>
    %c0_i32_19 = arith.constant 0 : i32
    %41 = vector.broadcast %c0_i32_19 : i32 to vector<1x256xi32>
    %42 = arith.cmpi sge, %40, %41 : vector<1x256xi32>
    %43 = arith.andi %38, %42 : vector<1x256xi1>
    %c0_i32_20 = arith.constant 0 : i32
    %44 = vector.broadcast %c0_i32_20 : i32 to vector<1x256xi32>
    %45 = arith.addi %3, %44 : vector<1x256xi32>
    %c16_i32_21 = arith.constant 16 : i32
    %46 = vector.broadcast %c16_i32_21 : i32 to vector<1x256xi32>
    %47 = arith.cmpi slt, %45, %46 : vector<1x256xi32>
    %48 = arith.andi %43, %47 : vector<1x256xi1>
    %49 = arith.extui %48 : vector<1x256xi1> to vector<1x256xi32>
    %50 = arith.sitofp %49 : vector<1x256xi32> to vector<1x256xf32>
    %51 = vector.broadcast %50 : vector<1x256xf32> to vector<4x256xf32>
    %52 = arith.mulf %29, %51 : vector<4x256xf32>
    %c4 = arith.constant 4 : index
    %c0_22 = arith.constant 0 : index
    %53 = vector.load %arg9[%c4, %c0_22] : memref<36x256xf32, #tpu.memory_space<vmem>>, vector<4x256xf32>
    tpu.vector_store %arg9[%c4, %c0_22], %52 {strides = array<i32>} : memref<36x256xf32, #tpu.memory_space<vmem>>, vector<4x256xf32>,
    %c15_i32 = arith.constant 15 : i32
    %54 = tpu.dynamic_rotate %1 by %c15_i32 dim 1 : vector<4x256xf32>, i32 -> vector<4x256xf32>
    %c-1_i32_23 = arith.constant -1 : i32
    %55 = vector.broadcast %c-1_i32_23 : i32 to vector<1x256xi32>
    %56 = arith.addi %2, %55 : vector<1x256xi32>
    %c0_i32_24 = arith.constant 0 : i32
    %57 = vector.broadcast %c0_i32_24 : i32 to vector<1x256xi32>
    %58 = arith.cmpi sge, %56, %57 : vector<1x256xi32>
    %c-1_i32_25 = arith.constant -1 : i32
    %59 = vector.broadcast %c-1_i32_25 : i32 to vector<1x256xi32>
    %60 = arith.addi %2, %59 : vector<1x256xi32>
    %c16_i32_26 = arith.constant 16 : i32
    %61 = vector.broadcast %c16_i32_26 : i32 to vector<1x256xi32>
    %62 = arith.cmpi slt, %60, %61 : vector<1x256xi32>
    %63 = arith.andi %58, %62 : vector<1x256xi1>
    %c1_i32 = arith.constant 1 : i32
    %64 = vector.broadcast %c1_i32 : i32 to vector<1x256xi32>
    %65 = arith.addi %3, %64 : vector<1x256xi32>
    %c0_i32_27 = arith.constant 0 : i32
    %66 = vector.broadcast %c0_i32_27 : i32 to vector<1x256xi32>
    %67 = arith.cmpi sge, %65, %66 : vector<1x256xi32>
    %68 = arith.andi %63, %67 : vector<1x256xi1>
    %c1_i32_28 = arith.constant 1 : i32
    %69 = vector.broadcast %c1_i32_28 : i32 to vector<1x256xi32>
    %70 = arith.addi %3, %69 : vector<1x256xi32>
    %c16_i32_29 = arith.constant 16 : i32
    %71 = vector.broadcast %c16_i32_29 : i32 to vector<1x256xi32>
    %72 = arith.cmpi slt, %70, %71 : vector<1x256xi32>
    %73 = arith.andi %68, %72 : vector<1x256xi1>
    %74 = arith.extui %73 : vector<1x256xi1> to vector<1x256xi32>
    %75 = arith.sitofp %74 : vector<1x256xi32> to vector<1x256xf32>
    %76 = vector.broadcast %75 : vector<1x256xf32> to vector<4x256xf32>
    %77 = arith.mulf %54, %76 : vector<4x256xf32>
    %c8 = arith.constant 8 : index
    %c0_30 = arith.constant 0 : index
    %78 = vector.load %arg9[%c8, %c0_30] : memref<36x256xf32, #tpu.memory_space<vmem>>, vector<4x256xf32>
    tpu.vector_store %arg9[%c8, %c0_30], %77 {strides = array<i32>} : memref<36x256xf32, #tpu.memory_space<vmem>>, vector<4x256xf32>,
    %c1_i32_31 = arith.constant 1 : i32
    %79 = tpu.dynamic_rotate %1 by %c1_i32_31 dim 1 : vector<4x256xf32>, i32 -> vector<4x256xf32>
    %c0_i32_32 = arith.constant 0 : i32
    %80 = vector.broadcast %c0_i32_32 : i32 to vector<1x256xi32>
    %81 = arith.addi %2, %80 : vector<1x256xi32>
    %c0_i32_33 = arith.constant 0 : i32
    %82 = vector.broadcast %c0_i32_33 : i32 to vector<1x256xi32>
    %83 = arith.cmpi sge, %81, %82 : vector<1x256xi32>
    %c0_i32_34 = arith.constant 0 : i32
    %84 = vector.broadcast %c0_i32_34 : i32 to vector<1x256xi32>
    %85 = arith.addi %2, %84 : vector<1x256xi32>
    %c16_i32_35 = arith.constant 16 : i32
    %86 = vector.broadcast %c16_i32_35 : i32 to vector<1x256xi32>
    %87 = arith.cmpi slt, %85, %86 : vector<1x256xi32>
    %88 = arith.andi %83, %87 : vector<1x256xi1>
    %c-1_i32_36 = arith.constant -1 : i32
    %89 = vector.broadcast %c-1_i32_36 : i32 to vector<1x256xi32>
    %90 = arith.addi %3, %89 : vector<1x256xi32>
    %c0_i32_37 = arith.constant 0 : i32
    %91 = vector.broadcast %c0_i32_37 : i32 to vector<1x256xi32>
    %92 = arith.cmpi sge, %90, %91 : vector<1x256xi32>
    %93 = arith.andi %88, %92 : vector<1x256xi1>
    %c-1_i32_38 = arith.constant -1 : i32
    %94 = vector.broadcast %c-1_i32_38 : i32 to vector<1x256xi32>
    %95 = arith.addi %3, %94 : vector<1x256xi32>
    %c16_i32_39 = arith.constant 16 : i32
    %96 = vector.broadcast %c16_i32_39 : i32 to vector<1x256xi32>
    %97 = arith.cmpi slt, %95, %96 : vector<1x256xi32>
    %98 = arith.andi %93, %97 : vector<1x256xi1>
    %99 = arith.extui %98 : vector<1x256xi1> to vector<1x256xi32>
    %100 = arith.sitofp %99 : vector<1x256xi32> to vector<1x256xf32>
    %101 = vector.broadcast %100 : vector<1x256xf32> to vector<4x256xf32>
    %102 = arith.mulf %79, %101 : vector<4x256xf32>
    %c12 = arith.constant 12 : index
    %c0_40 = arith.constant 0 : index
    %103 = vector.load %arg9[%c12, %c0_40] : memref<36x256xf32, #tpu.memory_space<vmem>>, vector<4x256xf32>
    tpu.vector_store %arg9[%c12, %c0_40], %102 {strides = array<i32>} : memref<36x256xf32, #tpu.memory_space<vmem>>, vector<4x256xf32>,
    %c16 = arith.constant 16 : index
    %c0_41 = arith.constant 0 : index
    %104 = vector.load %arg9[%c16, %c0_41] : memref<36x256xf32, #tpu.memory_space<vmem>>, vector<4x256xf32>
    tpu.vector_store %arg9[%c16, %c0_41], %1 {strides = array<i32>} : memref<36x256xf32, #tpu.memory_space<vmem>>, vector<4x256xf32>,
    %c255_i32 = arith.constant 255 : i32
    %105 = tpu.dynamic_rotate %1 by %c255_i32 dim 1 : vector<4x256xf32>, i32 -> vector<4x256xf32>
    %c0_i32_42 = arith.constant 0 : i32
    %106 = vector.broadcast %c0_i32_42 : i32 to vector<1x256xi32>
    %107 = arith.addi %2, %106 : vector<1x256xi32>
    %c0_i32_43 = arith.constant 0 : i32
    %108 = vector.broadcast %c0_i32_43 : i32 to vector<1x256xi32>
    %109 = arith.cmpi sge, %107, %108 : vector<1x256xi32>
    %c0_i32_44 = arith.constant 0 : i32
    %110 = vector.broadcast %c0_i32_44 : i32 to vector<1x256xi32>
    %111 = arith.addi %2, %110 : vector<1x256xi32>
    %c16_i32_45 = arith.constant 16 : i32
    %112 = vector.broadcast %c16_i32_45 : i32 to vector<1x256xi32>
    %113 = arith.cmpi slt, %111, %112 : vector<1x256xi32>
    %114 = arith.andi %109, %113 : vector<1x256xi1>
    %c1_i32_46 = arith.constant 1 : i32
    %115 = vector.broadcast %c1_i32_46 : i32 to vector<1x256xi32>
    %116 = arith.addi %3, %115 : vector<1x256xi32>
    %c0_i32_47 = arith.constant 0 : i32
    %117 = vector.broadcast %c0_i32_47 : i32 to vector<1x256xi32>
    %118 = arith.cmpi sge, %116, %117 : vector<1x256xi32>
    %119 = arith.andi %114, %118 : vector<1x256xi1>
    %c1_i32_48 = arith.constant 1 : i32
    %120 = vector.broadcast %c1_i32_48 : i32 to vector<1x256xi32>
    %121 = arith.addi %3, %120 : vector<1x256xi32>
    %c16_i32_49 = arith.constant 16 : i32
    %122 = vector.broadcast %c16_i32_49 : i32 to vector<1x256xi32>
    %123 = arith.cmpi slt, %121, %122 : vector<1x256xi32>
    %124 = arith.andi %119, %123 : vector<1x256xi1>
    %125 = arith.extui %124 : vector<1x256xi1> to vector<1x256xi32>
    %126 = arith.sitofp %125 : vector<1x256xi32> to vector<1x256xf32>
    %127 = vector.broadcast %126 : vector<1x256xf32> to vector<4x256xf32>
    %128 = arith.mulf %105, %127 : vector<4x256xf32>
    %c20 = arith.constant 20 : index
    %c0_50 = arith.constant 0 : index
    %129 = vector.load %arg9[%c20, %c0_50] : memref<36x256xf32, #tpu.memory_space<vmem>>, vector<4x256xf32>
    tpu.vector_store %arg9[%c20, %c0_50], %128 {strides = array<i32>} : memref<36x256xf32, #tpu.memory_space<vmem>>, vector<4x256xf32>,
    %c241_i32 = arith.constant 241 : i32
    %130 = tpu.dynamic_rotate %1 by %c241_i32 dim 1 : vector<4x256xf32>, i32 -> vector<4x256xf32>
    %c1_i32_51 = arith.constant 1 : i32
    %131 = vector.broadcast %c1_i32_51 : i32 to vector<1x256xi32>
    %132 = arith.addi %2, %131 : vector<1x256xi32>
    %c0_i32_52 = arith.constant 0 : i32
    %133 = vector.broadcast %c0_i32_52 : i32 to vector<1x256xi32>
    %134 = arith.cmpi sge, %132, %133 : vector<1x256xi32>
    %c1_i32_53 = arith.constant 1 : i32
    %135 = vector.broadcast %c1_i32_53 : i32 to vector<1x256xi32>
    %136 = arith.addi %2, %135 : vector<1x256xi32>
    %c16_i32_54 = arith.constant 16 : i32
    %137 = vector.broadcast %c16_i32_54 : i32 to vector<1x256xi32>
    %138 = arith.cmpi slt, %136, %137 : vector<1x256xi32>
    %139 = arith.andi %134, %138 : vector<1x256xi1>
    %c-1_i32_55 = arith.constant -1 : i32
    %140 = vector.broadcast %c-1_i32_55 : i32 to vector<1x256xi32>
    %141 = arith.addi %3, %140 : vector<1x256xi32>
    %c0_i32_56 = arith.constant 0 : i32
    %142 = vector.broadcast %c0_i32_56 : i32 to vector<1x256xi32>
    %143 = arith.cmpi sge, %141, %142 : vector<1x256xi32>
    %144 = arith.andi %139, %143 : vector<1x256xi1>
    %c-1_i32_57 = arith.constant -1 : i32
    %145 = vector.broadcast %c-1_i32_57 : i32 to vector<1x256xi32>
    %146 = arith.addi %3, %145 : vector<1x256xi32>
    %c16_i32_58 = arith.constant 16 : i32
    %147 = vector.broadcast %c16_i32_58 : i32 to vector<1x256xi32>
    %148 = arith.cmpi slt, %146, %147 : vector<1x256xi32>
    %149 = arith.andi %144, %148 : vector<1x256xi1>
    %150 = arith.extui %149 : vector<1x256xi1> to vector<1x256xi32>
    %151 = arith.sitofp %150 : vector<1x256xi32> to vector<1x256xf32>
    %152 = vector.broadcast %151 : vector<1x256xf32> to vector<4x256xf32>
    %153 = arith.mulf %130, %152 : vector<4x256xf32>
    %c24 = arith.constant 24 : index
    %c0_59 = arith.constant 0 : index
    %154 = vector.load %arg9[%c24, %c0_59] : memref<36x256xf32, #tpu.memory_space<vmem>>, vector<4x256xf32>
    tpu.vector_store %arg9[%c24, %c0_59], %153 {strides = array<i32>} : memref<36x256xf32, #tpu.memory_space<vmem>>, vector<4x256xf32>,
    %c240_i32 = arith.constant 240 : i32
    %155 = tpu.dynamic_rotate %1 by %c240_i32 dim 1 : vector<4x256xf32>, i32 -> vector<4x256xf32>
    %c1_i32_60 = arith.constant 1 : i32
    %156 = vector.broadcast %c1_i32_60 : i32 to vector<1x256xi32>
    %157 = arith.addi %2, %156 : vector<1x256xi32>
    %c0_i32_61 = arith.constant 0 : i32
    %158 = vector.broadcast %c0_i32_61 : i32 to vector<1x256xi32>
    %159 = arith.cmpi sge, %157, %158 : vector<1x256xi32>
    %c1_i32_62 = arith.constant 1 : i32
    %160 = vector.broadcast %c1_i32_62 : i32 to vector<1x256xi32>
    %161 = arith.addi %2, %160 : vector<1x256xi32>
    %c16_i32_63 = arith.constant 16 : i32
    %162 = vector.broadcast %c16_i32_63 : i32 to vector<1x256xi32>
    %163 = arith.cmpi slt, %161, %162 : vector<1x256xi32>
    %164 = arith.andi %159, %163 : vector<1x256xi1>
    %c0_i32_64 = arith.constant 0 : i32
    %165 = vector.broadcast %c0_i32_64 : i32 to vector<1x256xi32>
    %166 = arith.addi %3, %165 : vector<1x256xi32>
    %c0_i32_65 = arith.constant 0 : i32
    %167 = vector.broadcast %c0_i32_65 : i32 to vector<1x256xi32>
    %168 = arith.cmpi sge, %166, %167 : vector<1x256xi32>
    %169 = arith.andi %164, %168 : vector<1x256xi1>
    %c0_i32_66 = arith.constant 0 : i32
    %170 = vector.broadcast %c0_i32_66 : i32 to vector<1x256xi32>
    %171 = arith.addi %3, %170 : vector<1x256xi32>
    %c16_i32_67 = arith.constant 16 : i32
    %172 = vector.broadcast %c16_i32_67 : i32 to vector<1x256xi32>
    %173 = arith.cmpi slt, %171, %172 : vector<1x256xi32>
    %174 = arith.andi %169, %173 : vector<1x256xi1>
    %175 = arith.extui %174 : vector<1x256xi1> to vector<1x256xi32>
    %176 = arith.sitofp %175 : vector<1x256xi32> to vector<1x256xf32>
    %177 = vector.broadcast %176 : vector<1x256xf32> to vector<4x256xf32>
    %178 = arith.mulf %155, %177 : vector<4x256xf32>
    %c28 = arith.constant 28 : index
    %c0_68 = arith.constant 0 : index
    %179 = vector.load %arg9[%c28, %c0_68] : memref<36x256xf32, #tpu.memory_space<vmem>>, vector<4x256xf32>
    tpu.vector_store %arg9[%c28, %c0_68], %178 {strides = array<i32>} : memref<36x256xf32, #tpu.memory_space<vmem>>, vector<4x256xf32>,
    %c239_i32 = arith.constant 239 : i32
    %180 = tpu.dynamic_rotate %1 by %c239_i32 dim 1 : vector<4x256xf32>, i32 -> vector<4x256xf32>
    %c1_i32_69 = arith.constant 1 : i32
    %181 = vector.broadcast %c1_i32_69 : i32 to vector<1x256xi32>
    %182 = arith.addi %2, %181 : vector<1x256xi32>
    %c0_i32_70 = arith.constant 0 : i32
    %183 = vector.broadcast %c0_i32_70 : i32 to vector<1x256xi32>
    %184 = arith.cmpi sge, %182, %183 : vector<1x256xi32>
    %c1_i32_71 = arith.constant 1 : i32
    %185 = vector.broadcast %c1_i32_71 : i32 to vector<1x256xi32>
    %186 = arith.addi %2, %185 : vector<1x256xi32>
    %c16_i32_72 = arith.constant 16 : i32
    %187 = vector.broadcast %c16_i32_72 : i32 to vector<1x256xi32>
    %188 = arith.cmpi slt, %186, %187 : vector<1x256xi32>
    %189 = arith.andi %184, %188 : vector<1x256xi1>
    %c1_i32_73 = arith.constant 1 : i32
    %190 = vector.broadcast %c1_i32_73 : i32 to vector<1x256xi32>
    %191 = arith.addi %3, %190 : vector<1x256xi32>
    %c0_i32_74 = arith.constant 0 : i32
    %192 = vector.broadcast %c0_i32_74 : i32 to vector<1x256xi32>
    %193 = arith.cmpi sge, %191, %192 : vector<1x256xi32>
    %194 = arith.andi %189, %193 : vector<1x256xi1>
    %c1_i32_75 = arith.constant 1 : i32
    %195 = vector.broadcast %c1_i32_75 : i32 to vector<1x256xi32>
    %196 = arith.addi %3, %195 : vector<1x256xi32>
    %c16_i32_76 = arith.constant 16 : i32
    %197 = vector.broadcast %c16_i32_76 : i32 to vector<1x256xi32>
    %198 = arith.cmpi slt, %196, %197 : vector<1x256xi32>
    %199 = arith.andi %194, %198 : vector<1x256xi1>
    %200 = arith.extui %199 : vector<1x256xi1> to vector<1x256xi32>
    %201 = arith.sitofp %200 : vector<1x256xi32> to vector<1x256xf32>
    %202 = vector.broadcast %201 : vector<1x256xf32> to vector<4x256xf32>
    %203 = arith.mulf %180, %202 : vector<4x256xf32>
    %c32 = arith.constant 32 : index
    %c0_77 = arith.constant 0 : index
    %204 = vector.load %arg9[%c32, %c0_77] : memref<36x256xf32, #tpu.memory_space<vmem>>, vector<4x256xf32>
    tpu.vector_store %arg9[%c32, %c0_77], %203 {strides = array<i32>} : memref<36x256xf32, #tpu.memory_space<vmem>>, vector<4x256xf32>,
    %c0_78 = arith.constant 0 : index
    %c0_79 = arith.constant 0 : index
    %205 = vector.load %arg4[%c0_78, %c0_79] : memref<4x36xf32, #tpu.memory_space<vmem>>, vector<4x36xf32>
    %c0_80 = arith.constant 0 : index
    %c0_81 = arith.constant 0 : index
    %206 = vector.load %arg9[%c0_80, %c0_81] : memref<36x256xf32, #tpu.memory_space<vmem>>, vector<36x256xf32>
    %cst = arith.constant dense<0.000000e+00> : vector<4x256xf32>
    %207 = tpu.matmul %205, %206, %cst {dimension_numbers = #tpu.dot_dimension_numbers<[1], [0], [0], [1], [0, 0, 1, 1], [], []>} : vector<4x36xf32>, vector<36x256xf32>, vector<4x256xf32> -> vector<4x256xf32>
    %c0_82 = arith.constant 0 : index
    %c0_83 = arith.constant 0 : index
    %208 = vector.load %arg5[%c0_82, %c0_83] : memref<4x1xf32, #tpu.memory_space<vmem>>, vector<4x1xf32>
    %209 = vector.broadcast %208 : vector<4x1xf32> to vector<4x256xf32>
    %210 = arith.addf %207, %209 : vector<4x256xf32>
    %cst_84 = arith.constant 0.000000e+00 : f32
    %211 = vector.broadcast %cst_84 : f32 to vector<4x256xf32>
    %212 = arith.maximumf %210, %211 : vector<4x256xf32>
    %c34_i32 = arith.constant 34 : i32
    %213 = tpu.dynamic_rotate %212 by %c34_i32 dim 1 : vector<4x256xf32>, i32 -> vector<4x256xf32>
    %c-2_i32 = arith.constant -2 : i32
    %214 = vector.broadcast %c-2_i32 : i32 to vector<1x256xi32>
    %215 = arith.addi %2, %214 : vector<1x256xi32>
    %c0_i32_85 = arith.constant 0 : i32
    %216 = vector.broadcast %c0_i32_85 : i32 to vector<1x256xi32>
    %217 = arith.cmpi sge, %215, %216 : vector<1x256xi32>
    %c-2_i32_86 = arith.constant -2 : i32
    %218 = vector.broadcast %c-2_i32_86 : i32 to vector<1x256xi32>
    %219 = arith.addi %2, %218 : vector<1x256xi32>
    %c16_i32_87 = arith.constant 16 : i32
    %220 = vector.broadcast %c16_i32_87 : i32 to vector<1x256xi32>
    %221 = arith.cmpi slt, %219, %220 : vector<1x256xi32>
    %222 = arith.andi %217, %221 : vector<1x256xi1>
    %c-2_i32_88 = arith.constant -2 : i32
    %223 = vector.broadcast %c-2_i32_88 : i32 to vector<1x256xi32>
    %224 = arith.addi %3, %223 : vector<1x256xi32>
    %c0_i32_89 = arith.constant 0 : i32
    %225 = vector.broadcast %c0_i32_89 : i32 to vector<1x256xi32>
    %226 = arith.cmpi sge, %224, %225 : vector<1x256xi32>
    %227 = arith.andi %222, %226 : vector<1x256xi1>
    %c-2_i32_90 = arith.constant -2 : i32
    %228 = vector.broadcast %c-2_i32_90 : i32 to vector<1x256xi32>
    %229 = arith.addi %3, %228 : vector<1x256xi32>
    %c16_i32_91 = arith.constant 16 : i32
    %230 = vector.broadcast %c16_i32_91 : i32 to vector<1x256xi32>
    %231 = arith.cmpi slt, %229, %230 : vector<1x256xi32>
    %232 = arith.andi %227, %231 : vector<1x256xi1>
    %233 = arith.extui %232 : vector<1x256xi1> to vector<1x256xi32>
    %234 = arith.sitofp %233 : vector<1x256xi32> to vector<1x256xf32>
    %235 = vector.broadcast %234 : vector<1x256xf32> to vector<4x256xf32>
    %236 = arith.mulf %213, %235 : vector<4x256xf32>
    %c0_92 = arith.constant 0 : index
    %c0_93 = arith.constant 0 : index
    %237 = vector.load %arg9[%c0_92, %c0_93] : memref<36x256xf32, #tpu.memory_space<vmem>>, vector<4x256xf32>
    tpu.vector_store %arg9[%c0_92, %c0_93], %236 {strides = array<i32>} : memref<36x256xf32, #tpu.memory_space<vmem>>, vector<4x256xf32>,
    %c32_i32 = arith.constant 32 : i32
    %238 = tpu.dynamic_rotate %212 by %c32_i32 dim 1 : vector<4x256xf32>, i32 -> vector<4x256xf32>
    %c-2_i32_94 = arith.constant -2 : i32
    %239 = vector.broadcast %c-2_i32_94 : i32 to vector<1x256xi32>
    %240 = arith.addi %2, %239 : vector<1x256xi32>
    %c0_i32_95 = arith.constant 0 : i32
    %241 = vector.broadcast %c0_i32_95 : i32 to vector<1x256xi32>
    %242 = arith.cmpi sge, %240, %241 : vector<1x256xi32>
    %c-2_i32_96 = arith.constant -2 : i32
    %243 = vector.broadcast %c-2_i32_96 : i32 to vector<1x256xi32>
    %244 = arith.addi %2, %243 : vector<1x256xi32>
    %c16_i32_97 = arith.constant 16 : i32
    %245 = vector.broadcast %c16_i32_97 : i32 to vector<1x256xi32>
    %246 = arith.cmpi slt, %244, %245 : vector<1x256xi32>
    %247 = arith.andi %242, %246 : vector<1x256xi1>
    %c0_i32_98 = arith.constant 0 : i32
    %248 = vector.broadcast %c0_i32_98 : i32 to vector<1x256xi32>
    %249 = arith.addi %3, %248 : vector<1x256xi32>
    %c0_i32_99 = arith.constant 0 : i32
    %250 = vector.broadcast %c0_i32_99 : i32 to vector<1x256xi32>
    %251 = arith.cmpi sge, %249, %250 : vector<1x256xi32>
    %252 = arith.andi %247, %251 : vector<1x256xi1>
    %c0_i32_100 = arith.constant 0 : i32
    %253 = vector.broadcast %c0_i32_100 : i32 to vector<1x256xi32>
    %254 = arith.addi %3, %253 : vector<1x256xi32>
    %c16_i32_101 = arith.constant 16 : i32
    %255 = vector.broadcast %c16_i32_101 : i32 to vector<1x256xi32>
    %256 = arith.cmpi slt, %254, %255 : vector<1x256xi32>
    %257 = arith.andi %252, %256 : vector<1x256xi1>
    %258 = arith.extui %257 : vector<1x256xi1> to vector<1x256xi32>
    %259 = arith.sitofp %258 : vector<1x256xi32> to vector<1x256xf32>
    %260 = vector.broadcast %259 : vector<1x256xf32> to vector<4x256xf32>
    %261 = arith.mulf %238, %260 : vector<4x256xf32>
    %c4_102 = arith.constant 4 : index
    %c0_103 = arith.constant 0 : index
    %262 = vector.load %arg9[%c4_102, %c0_103] : memref<36x256xf32, #tpu.memory_space<vmem>>, vector<4x256xf32>
    tpu.vector_store %arg9[%c4_102, %c0_103], %261 {strides = array<i32>} : memref<36x256xf32, #tpu.memory_space<vmem>>, vector<4x256xf32>,
    %c30_i32 = arith.constant 30 : i32
    %263 = tpu.dynamic_rotate %212 by %c30_i32 dim 1 : vector<4x256xf32>, i32 -> vector<4x256xf32>
    %c-2_i32_104 = arith.constant -2 : i32
    %264 = vector.broadcast %c-2_i32_104 : i32 to vector<1x256xi32>
    %265 = arith.addi %2, %264 : vector<1x256xi32>
    %c0_i32_105 = arith.constant 0 : i32
    %266 = vector.broadcast %c0_i32_105 : i32 to vector<1x256xi32>
    %267 = arith.cmpi sge, %265, %266 : vector<1x256xi32>
    %c-2_i32_106 = arith.constant -2 : i32
    %268 = vector.broadcast %c-2_i32_106 : i32 to vector<1x256xi32>
    %269 = arith.addi %2, %268 : vector<1x256xi32>
    %c16_i32_107 = arith.constant 16 : i32
    %270 = vector.broadcast %c16_i32_107 : i32 to vector<1x256xi32>
    %271 = arith.cmpi slt, %269, %270 : vector<1x256xi32>
    %272 = arith.andi %267, %271 : vector<1x256xi1>
    %c2_i32 = arith.constant 2 : i32
    %273 = vector.broadcast %c2_i32 : i32 to vector<1x256xi32>
    %274 = arith.addi %3, %273 : vector<1x256xi32>
    %c0_i32_108 = arith.constant 0 : i32
    %275 = vector.broadcast %c0_i32_108 : i32 to vector<1x256xi32>
    %276 = arith.cmpi sge, %274, %275 : vector<1x256xi32>
    %277 = arith.andi %272, %276 : vector<1x256xi1>
    %c2_i32_109 = arith.constant 2 : i32
    %278 = vector.broadcast %c2_i32_109 : i32 to vector<1x256xi32>
    %279 = arith.addi %3, %278 : vector<1x256xi32>
    %c16_i32_110 = arith.constant 16 : i32
    %280 = vector.broadcast %c16_i32_110 : i32 to vector<1x256xi32>
    %281 = arith.cmpi slt, %279, %280 : vector<1x256xi32>
    %282 = arith.andi %277, %281 : vector<1x256xi1>
    %283 = arith.extui %282 : vector<1x256xi1> to vector<1x256xi32>
    %284 = arith.sitofp %283 : vector<1x256xi32> to vector<1x256xf32>
    %285 = vector.broadcast %284 : vector<1x256xf32> to vector<4x256xf32>
    %286 = arith.mulf %263, %285 : vector<4x256xf32>
    %c8_111 = arith.constant 8 : index
    %c0_112 = arith.constant 0 : index
    %287 = vector.load %arg9[%c8_111, %c0_112] : memref<36x256xf32, #tpu.memory_space<vmem>>, vector<4x256xf32>
    tpu.vector_store %arg9[%c8_111, %c0_112], %286 {strides = array<i32>} : memref<36x256xf32, #tpu.memory_space<vmem>>, vector<4x256xf32>,
    %c2_i32_113 = arith.constant 2 : i32
    %288 = tpu.dynamic_rotate %212 by %c2_i32_113 dim 1 : vector<4x256xf32>, i32 -> vector<4x256xf32>
    %c0_i32_114 = arith.constant 0 : i32
    %289 = vector.broadcast %c0_i32_114 : i32 to vector<1x256xi32>
    %290 = arith.addi %2, %289 : vector<1x256xi32>
    %c0_i32_115 = arith.constant 0 : i32
    %291 = vector.broadcast %c0_i32_115 : i32 to vector<1x256xi32>
    %292 = arith.cmpi sge, %290, %291 : vector<1x256xi32>
    %c0_i32_116 = arith.constant 0 : i32
    %293 = vector.broadcast %c0_i32_116 : i32 to vector<1x256xi32>
    %294 = arith.addi %2, %293 : vector<1x256xi32>
    %c16_i32_117 = arith.constant 16 : i32
    %295 = vector.broadcast %c16_i32_117 : i32 to vector<1x256xi32>
    %296 = arith.cmpi slt, %294, %295 : vector<1x256xi32>
    %297 = arith.andi %292, %296 : vector<1x256xi1>
    %c-2_i32_118 = arith.constant -2 : i32
    %298 = vector.broadcast %c-2_i32_118 : i32 to vector<1x256xi32>
    %299 = arith.addi %3, %298 : vector<1x256xi32>
    %c0_i32_119 = arith.constant 0 : i32
    %300 = vector.broadcast %c0_i32_119 : i32 to vector<1x256xi32>
    %301 = arith.cmpi sge, %299, %300 : vector<1x256xi32>
    %302 = arith.andi %297, %301 : vector<1x256xi1>
    %c-2_i32_120 = arith.constant -2 : i32
    %303 = vector.broadcast %c-2_i32_120 : i32 to vector<1x256xi32>
    %304 = arith.addi %3, %303 : vector<1x256xi32>
    %c16_i32_121 = arith.constant 16 : i32
    %305 = vector.broadcast %c16_i32_121 : i32 to vector<1x256xi32>
    %306 = arith.cmpi slt, %304, %305 : vector<1x256xi32>
    %307 = arith.andi %302, %306 : vector<1x256xi1>
    %308 = arith.extui %307 : vector<1x256xi1> to vector<1x256xi32>
    %309 = arith.sitofp %308 : vector<1x256xi32> to vector<1x256xf32>
    %310 = vector.broadcast %309 : vector<1x256xf32> to vector<4x256xf32>
    %311 = arith.mulf %288, %310 : vector<4x256xf32>
    %c12_122 = arith.constant 12 : index
    %c0_123 = arith.constant 0 : index
    %312 = vector.load %arg9[%c12_122, %c0_123] : memref<36x256xf32, #tpu.memory_space<vmem>>, vector<4x256xf32>
    tpu.vector_store %arg9[%c12_122, %c0_123], %311 {strides = array<i32>} : memref<36x256xf32, #tpu.memory_space<vmem>>, vector<4x256xf32>,
    %c16_124 = arith.constant 16 : index
    %c0_125 = arith.constant 0 : index
    %313 = vector.load %arg9[%c16_124, %c0_125] : memref<36x256xf32, #tpu.memory_space<vmem>>, vector<4x256xf32>
    tpu.vector_store %arg9[%c16_124, %c0_125], %212 {strides = array<i32>} : memref<36x256xf32, #tpu.memory_space<vmem>>, vector<4x256xf32>,
    %c254_i32 = arith.constant 254 : i32
    %314 = tpu.dynamic_rotate %212 by %c254_i32 dim 1 : vector<4x256xf32>, i32 -> vector<4x256xf32>
    %c0_i32_126 = arith.constant 0 : i32
    %315 = vector.broadcast %c0_i32_126 : i32 to vector<1x256xi32>
    %316 = arith.addi %2, %315 : vector<1x256xi32>
    %c0_i32_127 = arith.constant 0 : i32
    %317 = vector.broadcast %c0_i32_127 : i32 to vector<1x256xi32>
    %318 = arith.cmpi sge, %316, %317 : vector<1x256xi32>
    %c0_i32_128 = arith.constant 0 : i32
    %319 = vector.broadcast %c0_i32_128 : i32 to vector<1x256xi32>
    %320 = arith.addi %2, %319 : vector<1x256xi32>
    %c16_i32_129 = arith.constant 16 : i32
    %321 = vector.broadcast %c16_i32_129 : i32 to vector<1x256xi32>
    %322 = arith.cmpi slt, %320, %321 : vector<1x256xi32>
    %323 = arith.andi %318, %322 : vector<1x256xi1>
    %c2_i32_130 = arith.constant 2 : i32
    %324 = vector.broadcast %c2_i32_130 : i32 to vector<1x256xi32>
    %325 = arith.addi %3, %324 : vector<1x256xi32>
    %c0_i32_131 = arith.constant 0 : i32
    %326 = vector.broadcast %c0_i32_131 : i32 to vector<1x256xi32>
    %327 = arith.cmpi sge, %325, %326 : vector<1x256xi32>
    %328 = arith.andi %323, %327 : vector<1x256xi1>
    %c2_i32_132 = arith.constant 2 : i32
    %329 = vector.broadcast %c2_i32_132 : i32 to vector<1x256xi32>
    %330 = arith.addi %3, %329 : vector<1x256xi32>
    %c16_i32_133 = arith.constant 16 : i32
    %331 = vector.broadcast %c16_i32_133 : i32 to vector<1x256xi32>
    %332 = arith.cmpi slt, %330, %331 : vector<1x256xi32>
    %333 = arith.andi %328, %332 : vector<1x256xi1>
    %334 = arith.extui %333 : vector<1x256xi1> to vector<1x256xi32>
    %335 = arith.sitofp %334 : vector<1x256xi32> to vector<1x256xf32>
    %336 = vector.broadcast %335 : vector<1x256xf32> to vector<4x256xf32>
    %337 = arith.mulf %314, %336 : vector<4x256xf32>
    %c20_134 = arith.constant 20 : index
    %c0_135 = arith.constant 0 : index
    %338 = vector.load %arg9[%c20_134, %c0_135] : memref<36x256xf32, #tpu.memory_space<vmem>>, vector<4x256xf32>
    tpu.vector_store %arg9[%c20_134, %c0_135], %337 {strides = array<i32>} : memref<36x256xf32, #tpu.memory_space<vmem>>, vector<4x256xf32>,
    %c226_i32 = arith.constant 226 : i32
    %339 = tpu.dynamic_rotate %212 by %c226_i32 dim 1 : vector<4x256xf32>, i32 -> vector<4x256xf32>
    %c2_i32_136 = arith.constant 2 : i32
    %340 = vector.broadcast %c2_i32_136 : i32 to vector<1x256xi32>
    %341 = arith.addi %2, %340 : vector<1x256xi32>
    %c0_i32_137 = arith.constant 0 : i32
    %342 = vector.broadcast %c0_i32_137 : i32 to vector<1x256xi32>
    %343 = arith.cmpi sge, %341, %342 : vector<1x256xi32>
    %c2_i32_138 = arith.constant 2 : i32
    %344 = vector.broadcast %c2_i32_138 : i32 to vector<1x256xi32>
    %345 = arith.addi %2, %344 : vector<1x256xi32>
    %c16_i32_139 = arith.constant 16 : i32
    %346 = vector.broadcast %c16_i32_139 : i32 to vector<1x256xi32>
    %347 = arith.cmpi slt, %345, %346 : vector<1x256xi32>
    %348 = arith.andi %343, %347 : vector<1x256xi1>
    %c-2_i32_140 = arith.constant -2 : i32
    %349 = vector.broadcast %c-2_i32_140 : i32 to vector<1x256xi32>
    %350 = arith.addi %3, %349 : vector<1x256xi32>
    %c0_i32_141 = arith.constant 0 : i32
    %351 = vector.broadcast %c0_i32_141 : i32 to vector<1x256xi32>
    %352 = arith.cmpi sge, %350, %351 : vector<1x256xi32>
    %353 = arith.andi %348, %352 : vector<1x256xi1>
    %c-2_i32_142 = arith.constant -2 : i32
    %354 = vector.broadcast %c-2_i32_142 : i32 to vector<1x256xi32>
    %355 = arith.addi %3, %354 : vector<1x256xi32>
    %c16_i32_143 = arith.constant 16 : i32
    %356 = vector.broadcast %c16_i32_143 : i32 to vector<1x256xi32>
    %357 = arith.cmpi slt, %355, %356 : vector<1x256xi32>
    %358 = arith.andi %353, %357 : vector<1x256xi1>
    %359 = arith.extui %358 : vector<1x256xi1> to vector<1x256xi32>
    %360 = arith.sitofp %359 : vector<1x256xi32> to vector<1x256xf32>
    %361 = vector.broadcast %360 : vector<1x256xf32> to vector<4x256xf32>
    %362 = arith.mulf %339, %361 : vector<4x256xf32>
    %c24_144 = arith.constant 24 : index
    %c0_145 = arith.constant 0 : index
    %363 = vector.load %arg9[%c24_144, %c0_145] : memref<36x256xf32, #tpu.memory_space<vmem>>, vector<4x256xf32>
    tpu.vector_store %arg9[%c24_144, %c0_145], %362 {strides = array<i32>} : memref<36x256xf32, #tpu.memory_space<vmem>>, vector<4x256xf32>,
    %c224_i32 = arith.constant 224 : i32
    %364 = tpu.dynamic_rotate %212 by %c224_i32 dim 1 : vector<4x256xf32>, i32 -> vector<4x256xf32>
    %c2_i32_146 = arith.constant 2 : i32
    %365 = vector.broadcast %c2_i32_146 : i32 to vector<1x256xi32>
    %366 = arith.addi %2, %365 : vector<1x256xi32>
    %c0_i32_147 = arith.constant 0 : i32
    %367 = vector.broadcast %c0_i32_147 : i32 to vector<1x256xi32>
    %368 = arith.cmpi sge, %366, %367 : vector<1x256xi32>
    %c2_i32_148 = arith.constant 2 : i32
    %369 = vector.broadcast %c2_i32_148 : i32 to vector<1x256xi32>
    %370 = arith.addi %2, %369 : vector<1x256xi32>
    %c16_i32_149 = arith.constant 16 : i32
    %371 = vector.broadcast %c16_i32_149 : i32 to vector<1x256xi32>
    %372 = arith.cmpi slt, %370, %371 : vector<1x256xi32>
    %373 = arith.andi %368, %372 : vector<1x256xi1>
    %c0_i32_150 = arith.constant 0 : i32
    %374 = vector.broadcast %c0_i32_150 : i32 to vector<1x256xi32>
    %375 = arith.addi %3, %374 : vector<1x256xi32>
    %c0_i32_151 = arith.constant 0 : i32
    %376 = vector.broadcast %c0_i32_151 : i32 to vector<1x256xi32>
    %377 = arith.cmpi sge, %375, %376 : vector<1x256xi32>
    %378 = arith.andi %373, %377 : vector<1x256xi1>
    %c0_i32_152 = arith.constant 0 : i32
    %379 = vector.broadcast %c0_i32_152 : i32 to vector<1x256xi32>
    %380 = arith.addi %3, %379 : vector<1x256xi32>
    %c16_i32_153 = arith.constant 16 : i32
    %381 = vector.broadcast %c16_i32_153 : i32 to vector<1x256xi32>
    %382 = arith.cmpi slt, %380, %381 : vector<1x256xi32>
    %383 = arith.andi %378, %382 : vector<1x256xi1>
    %384 = arith.extui %383 : vector<1x256xi1> to vector<1x256xi32>
    %385 = arith.sitofp %384 : vector<1x256xi32> to vector<1x256xf32>
    %386 = vector.broadcast %385 : vector<1x256xf32> to vector<4x256xf32>
    %387 = arith.mulf %364, %386 : vector<4x256xf32>
    %c28_154 = arith.constant 28 : index
    %c0_155 = arith.constant 0 : index
    %388 = vector.load %arg9[%c28_154, %c0_155] : memref<36x256xf32, #tpu.memory_space<vmem>>, vector<4x256xf32>
    tpu.vector_store %arg9[%c28_154, %c0_155], %387 {strides = array<i32>} : memref<36x256xf32, #tpu.memory_space<vmem>>, vector<4x256xf32>,
    %c222_i32 = arith.constant 222 : i32
    %389 = tpu.dynamic_rotate %212 by %c222_i32 dim 1 : vector<4x256xf32>, i32 -> vector<4x256xf32>
    %c2_i32_156 = arith.constant 2 : i32
    %390 = vector.broadcast %c2_i32_156 : i32 to vector<1x256xi32>
    %391 = arith.addi %2, %390 : vector<1x256xi32>
    %c0_i32_157 = arith.constant 0 : i32
    %392 = vector.broadcast %c0_i32_157 : i32 to vector<1x256xi32>
    %393 = arith.cmpi sge, %391, %392 : vector<1x256xi32>
    %c2_i32_158 = arith.constant 2 : i32
    %394 = vector.broadcast %c2_i32_158 : i32 to vector<1x256xi32>
    %395 = arith.addi %2, %394 : vector<1x256xi32>
    %c16_i32_159 = arith.constant 16 : i32
    %396 = vector.broadcast %c16_i32_159 : i32 to vector<1x256xi32>
    %397 = arith.cmpi slt, %395, %396 : vector<1x256xi32>
    %398 = arith.andi %393, %397 : vector<1x256xi1>
    %c2_i32_160 = arith.constant 2 : i32
    %399 = vector.broadcast %c2_i32_160 : i32 to vector<1x256xi32>
    %400 = arith.addi %3, %399 : vector<1x256xi32>
    %c0_i32_161 = arith.constant 0 : i32
    %401 = vector.broadcast %c0_i32_161 : i32 to vector<1x256xi32>
    %402 = arith.cmpi sge, %400, %401 : vector<1x256xi32>
    %403 = arith.andi %398, %402 : vector<1x256xi1>
    %c2_i32_162 = arith.constant 2 : i32
    %404 = vector.broadcast %c2_i32_162 : i32 to vector<1x256xi32>
    %405 = arith.addi %3, %404 : vector<1x256xi32>
    %c16_i32_163 = arith.constant 16 : i32
    %406 = vector.broadcast %c16_i32_163 : i32 to vector<1x256xi32>
    %407 = arith.cmpi slt, %405, %406 : vector<1x256xi32>
    %408 = arith.andi %403, %407 : vector<1x256xi1>
    %409 = arith.extui %408 : vector<1x256xi1> to vector<1x256xi32>
    %410 = arith.sitofp %409 : vector<1x256xi32> to vector<1x256xf32>
    %411 = vector.broadcast %410 : vector<1x256xf32> to vector<4x256xf32>
    %412 = arith.mulf %389, %411 : vector<4x256xf32>
    %c32_164 = arith.constant 32 : index
    %c0_165 = arith.constant 0 : index
    %413 = vector.load %arg9[%c32_164, %c0_165] : memref<36x256xf32, #tpu.memory_space<vmem>>, vector<4x256xf32>
    tpu.vector_store %arg9[%c32_164, %c0_165], %412 {strides = array<i32>} : memref<36x256xf32, #tpu.memory_space<vmem>>, vector<4x256xf32>,
    %c0_166 = arith.constant 0 : index
    %c0_167 = arith.constant 0 : index
    %414 = vector.load %arg6[%c0_166, %c0_167] : memref<4x36xf32, #tpu.memory_space<vmem>>, vector<4x36xf32>
    %c0_168 = arith.constant 0 : index
    %c0_169 = arith.constant 0 : index
    %415 = vector.load %arg9[%c0_168, %c0_169] : memref<36x256xf32, #tpu.memory_space<vmem>>, vector<36x256xf32>
    %cst_170 = arith.constant dense<0.000000e+00> : vector<4x256xf32>
    %416 = tpu.matmul %414, %415, %cst_170 {dimension_numbers = #tpu.dot_dimension_numbers<[1], [0], [0], [1], [0, 0, 1, 1], [], []>} : vector<4x36xf32>, vector<36x256xf32>, vector<4x256xf32> -> vector<4x256xf32>
    %c0_171 = arith.constant 0 : index
    %c0_172 = arith.constant 0 : index
    %417 = vector.load %arg7[%c0_171, %c0_172] : memref<4x1xf32, #tpu.memory_space<vmem>>, vector<4x1xf32>
    %418 = vector.broadcast %417 : vector<4x1xf32> to vector<4x256xf32>
    %419 = arith.addf %416, %418 : vector<4x256xf32>
    %420 = arith.addf %419, %1 : vector<4x256xf32>
    %c0_173 = arith.constant 0 : index
    %c0_174 = arith.constant 0 : index
    %c0_175 = arith.constant 0 : index
    %421 = vector.load %arg8[%c0_173, %c0_174, %c0_175] : memref<1x4x256xf32, #tpu.memory_space<vmem>>, vector<1x4x256xf32>
    %422 = vector.shape_cast %421 : vector<1x4x256xf32> to vector<4x256xf32>
    %423 = vector.shape_cast %420 : vector<4x256xf32> to vector<1x4x256xf32>
    tpu.vector_store %arg8[%c0_173, %c0_174, %c0_175], %423 {strides = array<i32>} : memref<1x4x256xf32, #tpu.memory_space<vmem>>, vector<1x4x256xf32>,
    return
  }
  func.func @transform_0(%arg0: i32) -> (i32, i32, i32) {
    %c0_i32 = arith.constant 0 : i32
    %c0_i32_0 = arith.constant 0 : i32
    %c0_i32_1 = arith.constant 0 : i32
    return %arg0, %c0_i32, %c0_i32_0 : i32, i32, i32
  }
  func.func @transform_1(%arg0: i32) -> (i32, i32) {
    %c0_i32 = arith.constant 0 : i32
    %c0_i32_0 = arith.constant 0 : i32
    %c0_i32_1 = arith.constant 0 : i32
    return %c0_i32, %c0_i32_0 : i32, i32
  }
  func.func @transform_2(%arg0: i32) -> (i32, i32) {
    %c0_i32 = arith.constant 0 : i32
    %c0_i32_0 = arith.constant 0 : i32
    %c0_i32_1 = arith.constant 0 : i32
    return %c0_i32, %c0_i32_0 : i32, i32
  }
  func.func @transform_3(%arg0: i32) -> (i32, i32) {
    %c0_i32 = arith.constant 0 : i32
    %c0_i32_0 = arith.constant 0 : i32
    %c0_i32_1 = arith.constant 0 : i32
    return %c0_i32, %c0_i32_0 : i32, i32
  }
  func.func @transform_4(%arg0: i32) -> (i32, i32) {
    %c0_i32 = arith.constant 0 : i32
    %c0_i32_0 = arith.constant 0 : i32
    %c0_i32_1 = arith.constant 0 : i32
    return %c0_i32, %c0_i32_0 : i32, i32
  }
  func.func @transform_5(%arg0: i32) -> (i32, i32) {
    %c0_i32 = arith.constant 0 : i32
    %c0_i32_0 = arith.constant 0 : i32
    %c0_i32_1 = arith.constant 0 : i32
    return %c0_i32, %c0_i32_0 : i32, i32
  }
  func.func @transform_6(%arg0: i32) -> (i32, i32) {
    %c0_i32 = arith.constant 0 : i32
    %c0_i32_0 = arith.constant 0 : i32
    %c0_i32_1 = arith.constant 0 : i32
    return %c0_i32, %c0_i32_0 : i32, i32
  }
  func.func @transform_7(%arg0: i32) -> (i32, i32, i32) {
    %c0_i32 = arith.constant 0 : i32
    %c0_i32_0 = arith.constant 0 : i32
    %c0_i32_1 = arith.constant 0 : i32
    return %arg0, %c0_i32, %c0_i32_0 : i32, i32, i32
  }
}

</mosaic_0001>

<llo_original>
// kernel: tile.9
$region0: #{tile.9}
  %s0 = inlined_call_operand.vmem [shape: s32[16,16], index: 0, kind: input, shape index: {}]
  %s1 = inlined_call_operand.vmem [shape: s32[1,256], index: 1, kind: output, shape index: {}]
  $region1: #{tile.9} parent=0
    #allocation0 [shape = 'u8[8192]{0}', space=vmem, size = 0x2000, scoped, tag = 'scoped mem for output reshape']
    %s2 = smov 3
    %v3 = vld [vmem:[%s0] ss:$8 sm:%s2]
    %vm4 = vcmask 130048
    %5 = vst.msk [vmem:[#allocation0] ss:$8 sm:$0x3] %vm4, %v3
    %s6 = scalar_lea.vmem %s0, 7
    %s7 = smov 3
    %v8 = vld [vmem:[%s6] ss:$8 sm:%s7]
    %9 = vrot.lane.b32.xlu0 %v8, 112
    %v10 = vpop.permute.xlu0 %9
    %vm11 = vcmask 1048448
    %12 = vst.msk [vmem:[#allocation0] ss:$8 sm:$0x3] %vm11, %v10
    %s13 = scalar_lea.vmem %s0, 6
    %s14 = smov 3
    %v15 = vld [vmem:[%s13] ss:$8 sm:%s14]
    %16 = vrot.lane.b32.xlu0 %v15, 96
    %v17 = vpop.permute.xlu0 %16
    %vm18 = vcmask 917248
    %19 = vst.msk [vmem:[#allocation0] ss:$8 sm:$0x3] %vm18, %v17
    %s20 = scalar_lea.vmem %s0, 5
    %s21 = smov 3
    %v22 = vld [vmem:[%s20] ss:$8 sm:%s21]
    %23 = vrot.lane.b32.xlu0 %v22, 80
    %v24 = vpop.permute.xlu0 %23
    %vm25 = vcmask 786048
    %26 = vst.msk [vmem:[#allocation0] ss:$8 sm:$0x3] %vm25, %v24
    %s27 = scalar_lea.vmem %s0, 4
    %s28 = smov 3
    %v29 = vld [vmem:[%s27] ss:$8 sm:%s28]
    %30 = vrot.lane.b32.xlu0 %v29, 64
    %v31 = vpop.permute.xlu0 %30
    %vm32 = vcmask 654848
    %33 = vst.msk [vmem:[#allocation0] ss:$8 sm:$0x3] %vm32, %v31
    %s34 = scalar_lea.vmem %s0, 3
    %s35 = smov 3
    %v36 = vld [vmem:[%s34] ss:$8 sm:%s35]
    %37 = vrot.lane.b32.xlu0 %v36, 48
    %v38 = vpop.permute.xlu0 %37
    %vm39 = vcmask 523648
    %40 = vst.msk [vmem:[#allocation0] ss:$8 sm:$0x3] %vm39, %v38
    %s41 = scalar_lea.vmem %s0, 2
    %s42 = smov 3
    %v43 = vld [vmem:[%s41] ss:$8 sm:%s42]
    %44 = vrot.lane.b32.xlu0 %v43, 32
    %v45 = vpop.permute.xlu0 %44
    %vm46 = vcmask 392448
    %47 = vst.msk [vmem:[#allocation0] ss:$8 sm:$0x3] %vm46, %v45
    %s48 = scalar_lea.vmem %s0, 1
    %s49 = smov 3
    %v50 = vld [vmem:[%s48] ss:$8 sm:%s49]
    %51 = vrot.lane.b32.xlu0 %v50, 16
    %v52 = vpop.permute.xlu0 %51
    %vm53 = vcmask 261248
    %54 = vst.msk [vmem:[#allocation0] ss:$8 sm:$0x3] %vm53, %v52
    %s56 = sshllo.u32 0, 1
    %v58 = vld [vmem:[#allocation0] sm:%s56]
    %s59 = sshllo.u32 0, 1
    %60 = vst [vmem:[%s1] sm:%s59] %v58
    %s61 = scalar_lea.vmem [#allocation0], 8
    %v62 = vld [vmem:[%s61] sm:%s56]
    %s63 = sshllo.u32 0, 1
    %s64 = scalar_lea.vmem %s1, 1
    %65 = vst [vmem:[%s64] sm:%s63] %v62

// kernel: resnet_block_bn.1
$region0: #{resnet_block_bn.1}
  #allocation0 [shape = 'u32[]', space=smem, size = 0x4, offset = 0x4, fixed_abs, tag = 'smem constant byte address 0x4 - core index']
  #allocation1 [shape = 'u32[144,128]{1,0:T(1,128)}', space=vmem, size = 0x12000, scoped, tag = 'internal scratch']
  #allocation2 [shape = 'f32[36,256]{1,0:T(8,128)}', space=vmem, size = 0xa000, scoped, tag = 'scratch operand']
  %s0 = inlined_call_operand.vmem [shape: f32[2,4,256], index: 0, kind: input, shape index: {}]
  %s1 = inlined_call_operand.vmem [shape: s32[1,256], index: 1, kind: input, shape index: {}]
  %s2 = inlined_call_operand.vmem [shape: s32[1,256], index: 2, kind: input, shape index: {}]
  %s3 = inlined_call_operand.vmem [shape: f32[4,36], index: 3, kind: input, shape index: {}]
  %s4 = inlined_call_operand.vmem [shape: f32[4,1], index: 4, kind: input, shape index: {}]
  %s5 = inlined_call_operand.vmem [shape: f32[4,36], index: 5, kind: input, shape index: {}]
  %s6 = inlined_call_operand.vmem [shape: f32[4,1], index: 6, kind: input, shape index: {}]
  %s7 = inlined_call_operand.vmem [shape: f32[2,4,256], index: 7, kind: output, shape index: {}]
  %s8 = sld [smem:[#allocation0]]
  $region61: #{resnet_block_bn.1} parent=0
    _
  %s10 = ssub.s32 1, %s8
  %s11 = scalar_select 0, %s10, %s8
  loop: start=0, step=1, limit=4
  $region2: #{resnet_block_bn.1} parent=0 // loop_pre_header
    _
  $region3: #{resnet_block_bn.1} parent=0 // loop_header
    %s13 = sphi 0, %s17
    %p14 = scmp.ge.s32.totalorder %s13, 4
    %s23 = sphi 0, %s25
    %s26 = sphi 0, %s23
    %s27 = sphi 0, %s26
    %s43 = sphi 0, %s27
    %s47 = sphi 0, %s47
    %s49 = sphi 0, %s47
    %s50 = sphi 0, %s49
    %s64 = sphi 0, %s50
    %s68 = sphi 0, %s68
    %s70 = sphi 0, %s68
    %s71 = sphi 0, %s70
    %s85 = sphi 0, %s71
    %s89 = sphi 0, %s89
    %s91 = sphi 0, %s89
    %s92 = sphi 0, %s91
    %s106 = sphi 0, %s92
    %s110 = sphi 0, %s110
    %s112 = sphi 0, %s110
    %s113 = sphi 0, %s112
    %s127 = sphi 0, %s113
    %s131 = sphi 0, %s131
    %s133 = sphi 0, %s131
    %s134 = sphi 0, %s133
    %s148 = sphi 0, %s134
    %s152 = sphi 0, %s152
    %s154 = sphi 0, %s152
    %s155 = sphi 0, %s154
    %s169 = sphi 0, %s155
    %s175 = sphi 0, %s177
    %s178 = sphi 0, %s175
    %s179 = sphi 0, %s178
    %s195 = sphi 0, %s179
  $region4: #{resnet_block_bn.1} parent=0 // loop_header_branch
    %16 = sbr.rel (%p14) target = $region8
  $region5: #{resnet_block_bn.1} parent=0 // loop_body
    %s18 = ssub.s32 %s13, 1
    %s19 = ssub.s32 %s13, 2
    %s20 = sadd.s32 %s13, 1
    %s21 = ssub.s32 %s13, %s20
    %p22 = scmp.eq.s32.totalorder %s21, 0
    %s24 = sadd.s32 %s23, 1
    %s25 = scalar_select %p22, %s23, %s24
    %p28 = pneg %p22
    %p29 = scmp.eq.s32.totalorder %s13, 1
    %p30 = por %p28, %p29
    %p31 = scmp.ne.s32.totalorder %s23, %s26
    %p32 = scmp.eq.s32.totalorder %s13, 0
    %p33 = por %p31, %p32
    %p34 = scmp.ne.s32.totalorder %s23, %s26
    %p35 = scmp.eq.s32.totalorder %s18, 1
    %p36 = por %p34, %p35
    %p37 = scmp.ne.s32.totalorder %s26, %s27
    %p38 = scmp.eq.s32.totalorder %s18, 0
    %p39 = por %p37, %p38
    %p40 = scmp.ne.s32.totalorder %s26, %s27
    %p41 = scmp.eq.s32.totalorder %s19, 1
    %p42 = por %p40, %p41
    %p44 = scmp.ne.s32.totalorder %s27, %s43
    %p45 = scmp.eq.s32.totalorder %s19, 0
    %p46 = por %p44, %p45
    %s48 = sadd.s32 %s47, 1
    %p51 = scmp.eq.s32.totalorder %s13, 1
    %p52 = scmp.ne.s32.totalorder %s47, %s49
    %p53 = scmp.eq.s32.totalorder %s13, 0
    %p54 = por %p52, %p53
    %p55 = scmp.ne.s32.totalorder %s47, %s49
    %p56 = scmp.eq.s32.totalorder %s18, 1
    %p57 = por %p55, %p56
    %p58 = scmp.ne.s32.totalorder %s49, %s50
    %p59 = scmp.eq.s32.totalorder %s18, 0
    %p60 = por %p58, %p59
    %p61 = scmp.ne.s32.totalorder %s49, %s50
    %p62 = scmp.eq.s32.totalorder %s19, 1
    %p63 = por %p61, %p62
    %p65 = scmp.ne.s32.totalorder %s50, %s64
    %p66 = scmp.eq.s32.totalorder %s19, 0
    %p67 = por %p65, %p66
    %s69 = sadd.s32 %s68, 1
    %p72 = scmp.eq.s32.totalorder %s13, 1
    %p73 = scmp.ne.s32.totalorder %s68, %s70
    %p74 = scmp.eq.s32.totalorder %s13, 0
    %p75 = por %p73, %p74
    %p76 = scmp.ne.s32.totalorder %s68, %s70
    %p77 = scmp.eq.s32.totalorder %s18, 1
    %p78 = por %p76, %p77
    %p79 = scmp.ne.s32.totalorder %s70, %s71
    %p80 = scmp.eq.s32.totalorder %s18, 0
    %p81 = por %p79, %p80
    %p82 = scmp.ne.s32.totalorder %s70, %s71
    %p83 = scmp.eq.s32.totalorder %s19, 1
    %p84 = por %p82, %p83
    %p86 = scmp.ne.s32.totalorder %s71, %s85
    %p87 = scmp.eq.s32.totalorder %s19, 0
    %p88 = por %p86, %p87
    %s90 = sadd.s32 %s89, 1
    %p93 = scmp.eq.s32.totalorder %s13, 1
    %p94 = scmp.ne.s32.totalorder %s89, %s91
    %p95 = scmp.eq.s32.totalorder %s13, 0
    %p96 = por %p94, %p95
    %p97 = scmp.ne.s32.totalorder %s89, %s91
    %p98 = scmp.eq.s32.totalorder %s18, 1
    %p99 = por %p97, %p98
    %p100 = scmp.ne.s32.totalorder %s91, %s92
    %p101 = scmp.eq.s32.totalorder %s18, 0
    %p102 = por %p100, %p101
    %p103 = scmp.ne.s32.totalorder %s91, %s92
    %p104 = scmp.eq.s32.totalorder %s19, 1
    %p105 = por %p103, %p104
    %p107 = scmp.ne.s32.totalorder %s92, %s106
    %p108 = scmp.eq.s32.totalorder %s19, 0
    %p109 = por %p107, %p108
    %s111 = sadd.s32 %s110, 1
    %p114 = scmp.eq.s32.totalorder %s13, 1
    %p115 = scmp.ne.s32.totalorder %s110, %s112
    %p116 = scmp.eq.s32.totalorder %s13, 0
    %p117 = por %p115, %p116
    %p118 = scmp.ne.s32.totalorder %s110, %s112
    %p119 = scmp.eq.s32.totalorder %s18, 1
    %p120 = por %p118, %p119
    %p121 = scmp.ne.s32.totalorder %s112, %s113
    %p122 = scmp.eq.s32.totalorder %s18, 0
    %p123 = por %p121, %p122
    %p124 = scmp.ne.s32.totalorder %s112, %s113
    %p125 = scmp.eq.s32.totalorder %s19, 1
    %p126 = por %p124, %p125
    %p128 = scmp.ne.s32.totalorder %s113, %s127
    %p129 = scmp.eq.s32.totalorder %s19, 0
    %p130 = por %p128, %p129
    %s132 = sadd.s32 %s131, 1
    %p135 = scmp.eq.s32.totalorder %s13, 1
    %p136 = scmp.ne.s32.totalorder %s131, %s133
    %p137 = scmp.eq.s32.totalorder %s13, 0
    %p138 = por %p136, %p137
    %p139 = scmp.ne.s32.totalorder %s131, %s133
    %p140 = scmp.eq.s32.totalorder %s18, 1
    %p141 = por %p139, %p140
    %p142 = scmp.ne.s32.totalorder %s133, %s134
    %p143 = scmp.eq.s32.totalorder %s18, 0
    %p144 = por %p142, %p143
    %p145 = scmp.ne.s32.totalorder %s133, %s134
    %p146 = scmp.eq.s32.totalorder %s19, 1
    %p147 = por %p145, %p146
    %p149 = scmp.ne.s32.totalorder %s134, %s148
    %p150 = scmp.eq.s32.totalorder %s19, 0
    %p151 = por %p149, %p150
    %s153 = sadd.s32 %s152, 1
    %p156 = scmp.eq.s32.totalorder %s13, 1
    %p157 = scmp.ne.s32.totalorder %s152, %s154
    %p158 = scmp.eq.s32.totalorder %s13, 0
    %p159 = por %p157, %p158
    %p160 = scmp.ne.s32.totalorder %s152, %s154
    %p161 = scmp.eq.s32.totalorder %s18, 1
    %p162 = por %p160, %p161
    %p163 = scmp.ne.s32.totalorder %s154, %s155
    %p164 = scmp.eq.s32.totalorder %s18, 0
    %p165 = por %p163, %p164
    %p166 = scmp.ne.s32.totalorder %s154, %s155
    %p167 = scmp.eq.s32.totalorder %s19, 1
    %p168 = por %p166, %p167
    %p170 = scmp.ne.s32.totalorder %s155, %s169
    %p171 = scmp.eq.s32.totalorder %s19, 0
    %p172 = por %p170, %p171
    %s173 = ssub.s32 %s13, %s20
    %p174 = scmp.eq.s32.totalorder %s173, 0
    %s176 = sadd.s32 %s175, 1
    %s177 = scalar_select %p174, %s175, %s176
    %p180 = pneg %p174
    %p181 = scmp.eq.s32.totalorder %s13, 1
    %p182 = por %p180, %p181
    %p183 = scmp.ne.s32.totalorder %s175, %s178
    %p184 = scmp.eq.s32.totalorder %s13, 0
    %p185 = por %p183, %p184
    %p186 = scmp.ne.s32.totalorder %s175, %s178
    %p187 = scmp.eq.s32.totalorder %s18, 1
    %p188 = por %p186, %p187
    %p189 = scmp.ne.s32.totalorder %s178, %s179
    %p190 = scmp.eq.s32.totalorder %s18, 0
    %p191 = por %p189, %p190
    %p192 = scmp.ne.s32.totalorder %s178, %s179
    %p193 = scmp.eq.s32.totalorder %s19, 1
    %p194 = por %p192, %p193
    %p196 = scmp.ne.s32.totalorder %s179, %s195
    %p197 = scmp.eq.s32.totalorder %s19, 0
    %p198 = por %p196, %p197
    %p199 = scmp.le.s32.totalorder 1, %s13
    %p200 = scmp.lt.s32.totalorder %s13, 3
    %p201 = pnand %p199, %p200
    %p202 = pneg %p201
    // Predicated region
    $region9: #{resnet_block_bn.1} parent=5 // pred_check
      _
    $region10: #{resnet_block_bn.1} parent=5 // pred_check_branch
      %204 = sbr.rel (%p201) target = $region12
    $region11: #{resnet_block_bn.1} parent=5 // pred_region
      %s205 = ssub.s32 %s13, 1
      // Predicated region
      $region13: #{resnet_block_bn.1} parent=11 // pred_check
        %p206 = pneg %p60
      $region14: #{resnet_block_bn.1} parent=11 // pred_check_branch
        %208 = sbr.rel (%p206) target = $region16
      $region15: #{resnet_block_bn.1} parent=11 // pred_region
        _
      $region16: #{resnet_block_bn.1} parent=11 // pred_fallthru
        _
      // Predicated region
      $region17: #{resnet_block_bn.1} parent=11 // pred_check
        %p209 = pneg %p81
      $region18: #{resnet_block_bn.1} parent=11 // pred_check_branch
        %211 = sbr.rel (%p209) target = $region20
      $region19: #{resnet_block_bn.1} parent=11 // pred_region
        _
      $region20: #{resnet_block_bn.1} parent=11 // pred_fallthru
        _
      // Predicated region
      $region21: #{resnet_block_bn.1} parent=11 // pred_check
        %p212 = pneg %p102
      $region22: #{resnet_block_bn.1} parent=11 // pred_check_branch
        %214 = sbr.rel (%p212) target = $region24
      $region23: #{resnet_block_bn.1} parent=11 // pred_region
        _
      $region24: #{resnet_block_bn.1} parent=11 // pred_fallthru
        _
      // Predicated region
      $region25: #{resnet_block_bn.1} parent=11 // pred_check
        %p215 = pneg %p123
      $region26: #{resnet_block_bn.1} parent=11 // pred_check_branch
        %217 = sbr.rel (%p215) target = $region28
      $region27: #{resnet_block_bn.1} parent=11 // pred_region
        _
      $region28: #{resnet_block_bn.1} parent=11 // pred_fallthru
        _
      // Predicated region
      $region29: #{resnet_block_bn.1} parent=11 // pred_check
        %p218 = pneg %p144
      $region30: #{resnet_block_bn.1} parent=11 // pred_check_branch
        %220 = sbr.rel (%p218) target = $region32
      $region31: #{resnet_block_bn.1} parent=11 // pred_region
        _
      $region32: #{resnet_block_bn.1} parent=11 // pred_fallthru
        _
      // Predicated region
      $region33: #{resnet_block_bn.1} parent=11 // pred_check
        %p221 = pneg %p165
      $region34: #{resnet_block_bn.1} parent=11 // pred_check_branch
        %223 = sbr.rel (%p221) target = $region36
      $region35: #{resnet_block_bn.1} parent=11 // pred_region
        _
      $region36: #{resnet_block_bn.1} parent=11 // pred_fallthru
        _
    $region12: #{resnet_block_bn.1} parent=5 // pred_fallthru
      _
    %p224 = scmp.lt.s32.totalorder %s13, 2
    // Predicated region
    $region37: #{resnet_block_bn.1} parent=5 // pred_check
      %p225 = pneg %p224
    $region38: #{resnet_block_bn.1} parent=5 // pred_check_branch
      %227 = sbr.rel (%p225) target = $region40
    $region39: #{resnet_block_bn.1} parent=5 // pred_region
      // Predicated region
      $region41: #{resnet_block_bn.1} parent=39 // pred_check
        %p228 = pneg %p33
      $region42: #{resnet_block_bn.1} parent=39 // pred_check_branch
        %230 = sbr.rel (%p228) target = $region44
      $region43: #{resnet_block_bn.1} parent=39 // pred_region
        %p231 = scmp.lt.s32.totalorder %s13, 1
        %s232 = scalar_select %p231, %s13, 1
        %s233 = smul.addr %s232, 2
        %s234 = smul.addr %s233, 4
        %s235 = scalar_lea.vmem %s0, %s234
      $region44: #{resnet_block_bn.1} parent=39 // pred_fallthru
        _
    $region40: #{resnet_block_bn.1} parent=5 // pred_fallthru
      _
    %p236 = scmp.le.s32.totalorder 1, %s13
    %p237 = scmp.lt.s32.totalorder %s13, 3
    %p238 = pnand %p236, %p237
    %p239 = pneg %p238
    // Predicated region
    $region45: #{resnet_block_bn.1} parent=5 // pred_check
      _
    $region46: #{resnet_block_bn.1} parent=5 // pred_check_branch
      %241 = sbr.rel (%p238) target = $region48
    $region47: #{resnet_block_bn.1} parent=5 // pred_region
      %s242 = ssub.s32 %s13, 1
      %p243 = scmp.lt.s32.totalorder %s18, 1
      %s244 = scalar_select %p243, %s18, 1
      %s245 = smul.addr %s244, 2
      %s246 = smul.addr %s245, 4
      %s247 = scalar_lea.vmem %s0, %s246
      %p248 = pneg %p39
      %p249 = pneg %p36
      %p250 = pneg %p60
      %p251 = pneg %p57
      %p252 = pneg %p81
      %p253 = pneg %p78
      %p254 = pneg %p102
      %p255 = pneg %p99
      %p256 = pneg %p123
      %p257 = pneg %p120
      %p258 = pneg %p144
      %p259 = pneg %p141
      %p260 = pneg %p165
      %p261 = pneg %p162
      %p262 = pneg %p191
      %p263 = pneg %p188
      %p264 = scmp.lt.s32.totalorder %s18, 1
      %s265 = scalar_select %p264, %s18, 1
      %s266 = smul.addr %s265, 2
      %s267 = smul.addr %s266, 4
      %s268 = scalar_lea.vmem %s7, %s267
      %p269 = scmp.lt.s32.totalorder %s18, 1
      %s270 = scalar_select %p269, %s18, 1
      %s271 = smul.addr %s270, 2
      %s272 = smul.addr %s271, 4
      %s273 = scalar_lea.vmem %s0, %s272
      %p274 = scmp.lt.s32.totalorder %s18, 1
      %s275 = scalar_select %p274, %s18, 1
      %s276 = smul.addr %s275, 2
      %s277 = smul.addr %s276, 4
      %s278 = scalar_lea.vmem %s7, %s277
      %v279 = vld [vmem:[%s273] sm:$0xff]
      %v280 = vld [vmem:[%s1] sm:$0x3]
      %v281 = vld [vmem:[%s2] sm:$0x3]
      %v283 = vcombine.high %v279, %v279
      %285 = vrot.lane.b32.xlu0 %v279, 17
      %v286 = vpop.permute.xlu0 %285
      %287 = vrot.lane.b32.xlu0 %v283, 17
      %v288 = vpop.permute.xlu0 %287
      %v289 = vlaneseq
      %v290 = vand.u32 %v289, 127
      %vm291 = vcmp.lt.s32.totalorder %v290, 17
      %v292 = vsel %vm291, %v286, %v288
      %v293 = vsel %vm291, %v288, %v286
      %v294 = vadd.s32 %v280, 4294967295
      %vm295 = vcmp.ge.s32.totalorder %v294, 0
      %vm296 = vcmp.lt.s32.totalorder %v294, 16
      %vm297 = vmand %vm295, %vm296
      %v298 = vadd.s32 %v281, 4294967295
      %vm299 = vcmp.ge.s32.totalorder %v298, 0
      %vm300 = vmand %vm297, %vm299
      %vm301 = vcmp.lt.s32.totalorder %v298, 16
      %vm302 = vmand %vm300, %vm301
      %v303 = vsel %vm302, 1, 0
      %v304 = vcvt.s32.f32 %v303
      %v306 = vlaneseq
      %v307 = vshrl.u32 %v306, 7
      %v308 = vsub.s32 0, %v307
      %v309 = vrot.slane %v304, %v308
      %v310 = vlaneseq
      %v311 = vshrl.u32 %v310, 7
      %v312 = vsub.s32 1, %v311
      %v313 = vrot.slane %v304, %v312
      %v316 = vmul.f32 %v293, %v309
      %v317 = vmul.f32 %v292, %v313
      %318 = vst [vmem:[#allocation2] sm:$0xf] %v316
      %319 = vst [vmem:[#allocation2 + $0x8] sm:$0xf] %v317
      %320 = vrot.lane.b32.xlu0 %v279, 16
      %v321 = vpop.permute.xlu0 %320
      %322 = vrot.lane.b32.xlu0 %v283, 16
      %v323 = vpop.permute.xlu0 %322
      %vm324 = vcmp.lt.s32.totalorder %v290, 16
      %v325 = vsel %vm324, %v321, %v323
      %v326 = vsel %vm324, %v323, %v321
      %vm327 = vcmp.ge.s32.totalorder %v281, 0
      %vm328 = vmand %vm297, %vm327
      %vm329 = vcmp.lt.s32.totalorder %v281, 16
      %vm330 = vmand %vm328, %vm329
      %v331 = vsel %vm330, 1, 0
      %v332 = vcvt.s32.f32 %v331
      %v334 = vlaneseq
      %v335 = vshrl.u32 %v334, 7
      %v336 = vsub.s32 0, %v335
      %v337 = vrot.slane %v332, %v336
      %v338 = vlaneseq
      %v339 = vshrl.u32 %v338, 7
      %v340 = vsub.s32 1, %v339
      %v341 = vrot.slane %v332, %v340
      %v344 = vmul.f32 %v326, %v337
      %v345 = vmul.f32 %v325, %v341
      %v348 = vrot.slane %v344, 4
      %v349 = vrot.slane %v345, 4
      %352 = vst [vmem:[#allocation2] sm:$0xf0] %v348
      %353 = vst [vmem:[#allocation2 + $0x8] sm:$0xf0] %v349
      %354 = vrot.lane.b32.xlu0 %v279, 15
      %v355 = vpop.permute.xlu0 %354
      %356 = vrot.lane.b32.xlu0 %v283, 15
      %v357 = vpop.permute.xlu0 %356
      %vm358 = vcmp.lt.s32.totalorder %v290, 15
      %v359 = vsel %vm358, %v355, %v357
      %v360 = vsel %vm358, %v357, %v355
      %v361 = vadd.s32 %v281, 1
      %vm362 = vcmp.ge.s32.totalorder %v361, 0
      %vm363 = vmand %vm297, %vm362
      %vm364 = vcmp.lt.s32.totalorder %v361, 16
      %vm365 = vmand %vm363, %vm364
      %v366 = vsel %vm365, 1, 0
      %v367 = vcvt.s32.f32 %v366
      %v369 = vlaneseq
      %v370 = vshrl.u32 %v369, 7
      %v371 = vsub.s32 0, %v370
      %v372 = vrot.slane %v367, %v371
      %v373 = vlaneseq
      %v374 = vshrl.u32 %v373, 7
      %v375 = vsub.s32 1, %v374
      %v376 = vrot.slane %v367, %v375
      %v379 = vmul.f32 %v360, %v372
      %v380 = vmul.f32 %v359, %v376
      %381 = vst [vmem:[#allocation2 + $0x10] sm:$0xf] %v379
      %382 = vst [vmem:[#allocation2 + $0x18] sm:$0xf] %v380
      %383 = vrot.lane.b32.xlu0 %v279, 1
      %v384 = vpop.permute.xlu0 %383
      %385 = vrot.lane.b32.xlu0 %v283, 1
      %v386 = vpop.permute.xlu0 %385
      %vm387 = vcmp.lt.s32.totalorder %v290, 1
      %v388 = vsel %vm387, %v384, %v386
      %v389 = vsel %vm387, %v386, %v384
      %vm390 = vcmp.ge.s32.totalorder %v280, 0
      %vm391 = vcmp.lt.s32.totalorder %v280, 16
      %vm392 = vmand %vm390, %vm391
      %vm393 = vmand %vm392, %vm299
      %vm394 = vmand %vm393, %vm301
      %v395 = vsel %vm394, 1, 0
      %v396 = vcvt.s32.f32 %v395
      %v398 = vlaneseq
      %v399 = vshrl.u32 %v398, 7
      %v400 = vsub.s32 0, %v399
      %v401 = vrot.slane %v396, %v400
      %v402 = vlaneseq
      %v403 = vshrl.u32 %v402, 7
      %v404 = vsub.s32 1, %v403
      %v405 = vrot.slane %v396, %v404
      %v408 = vmul.f32 %v389, %v401
      %v409 = vmul.f32 %v388, %v405
      %v412 = vrot.slane %v408, 4
      %v413 = vrot.slane %v409, 4
      %416 = vst [vmem:[#allocation2 + $0x10] sm:$0xf0] %v412
      %417 = vst [vmem:[#allocation2 + $0x18] sm:$0xf0] %v413
      %418 = vst [vmem:[#allocation2 + $0x20] sm:$0xf] %v279
      %419 = vst [vmem:[#allocation2 + $0x28] sm:$0xf] %v283
      %420 = vrot.lane.b32.xlu0 %v279, 127
      %v421 = vpop.permute.xlu0 %420
      %422 = vrot.lane.b32.xlu0 %v283, 127
      %v423 = vpop.permute.xlu0 %422
      %vm424 = vcmp.lt.s32.totalorder %v290, 127
      %v425 = vsel %vm424, %v421, %v423
      %v426 = vsel %vm424, %v423, %v421
      %vm427 = vmand %vm392, %vm362
      %vm428 = vmand %vm427, %vm364
      %v429 = vsel %vm428, 1, 0
      %v430 = vcvt.s32.f32 %v429
      %v432 = vlaneseq
      %v433 = vshrl.u32 %v432, 7
      %v434 = vsub.s32 0, %v433
      %v435 = vrot.slane %v430, %v434
      %v436 = vlaneseq
      %v437 = vshrl.u32 %v436, 7
      %v438 = vsub.s32 1, %v437
      %v439 = vrot.slane %v430, %v438
      %v442 = vmul.f32 %v425, %v435
      %v443 = vmul.f32 %v426, %v439
      %v446 = vrot.slane %v442, 4
      %v447 = vrot.slane %v443, 4
      %450 = vst [vmem:[#allocation2 + $0x20] sm:$0xf0] %v446
      %451 = vst [vmem:[#allocation2 + $0x28] sm:$0xf0] %v447
      %452 = vrot.lane.b32.xlu0 %v279, 113
      %v453 = vpop.permute.xlu0 %452
      %454 = vrot.lane.b32.xlu0 %v283, 113
      %v455 = vpop.permute.xlu0 %454
      %vm456 = vcmp.lt.s32.totalorder %v290, 113
      %v457 = vsel %vm456, %v453, %v455
      %v458 = vsel %vm456, %v455, %v453
      %v459 = vadd.s32 %v280, 1
      %vm460 = vcmp.ge.s32.totalorder %v459, 0
      %vm461 = vcmp.lt.s32.totalorder %v459, 16
      %vm462 = vmand %vm460, %vm461
      %vm463 = vmand %vm462, %vm299
      %vm464 = vmand %vm463, %vm301
      %v465 = vsel %vm464, 1, 0
      %v466 = vcvt.s32.f32 %v465
      %v468 = vlaneseq
      %v469 = vshrl.u32 %v468, 7
      %v470 = vsub.s32 0, %v469
      %v471 = vrot.slane %v466, %v470
      %v472 = vlaneseq
      %v473 = vshrl.u32 %v472, 7
      %v474 = vsub.s32 1, %v473
      %v475 = vrot.slane %v466, %v474
      %v478 = vmul.f32 %v457, %v471
      %v479 = vmul.f32 %v458, %v475
      %480 = vst [vmem:[#allocation2 + $0x30] sm:$0xf] %v478
      %481 = vst [vmem:[#allocation2 + $0x38] sm:$0xf] %v479
      %482 = vrot.lane.b32.xlu0 %v279, 112
      %v483 = vpop.permute.xlu0 %482
      %484 = vrot.lane.b32.xlu0 %v283, 112
      %v485 = vpop.permute.xlu0 %484
      %vm486 = vcmp.lt.s32.totalorder %v290, 112
      %v487 = vsel %vm486, %v483, %v485
      %v488 = vsel %vm486, %v485, %v483
      %vm489 = vmand %vm462, %vm327
      %vm490 = vmand %vm489, %vm329
      %v491 = vsel %vm490, 1, 0
      %v492 = vcvt.s32.f32 %v491
      %v494 = vlaneseq
      %v495 = vshrl.u32 %v494, 7
      %v496 = vsub.s32 0, %v495
      %v497 = vrot.slane %v492, %v496
      %v498 = vlaneseq
      %v499 = vshrl.u32 %v498, 7
      %v500 = vsub.s32 1, %v499
      %v501 = vrot.slane %v492, %v500
      %v504 = vmul.f32 %v487, %v497
      %v505 = vmul.f32 %v488, %v501
      %v508 = vrot.slane %v504, 4
      %v509 = vrot.slane %v505, 4
      %512 = vst [vmem:[#allocation2 + $0x30] sm:$0xf0] %v508
      %513 = vst [vmem:[#allocation2 + $0x38] sm:$0xf0] %v509
      %514 = vrot.lane.b32.xlu0 %v279, 111
      %v515 = vpop.permute.xlu0 %514
      %516 = vrot.lane.b32.xlu0 %v283, 111
      %v517 = vpop.permute.xlu0 %516
      %vm518 = vcmp.lt.s32.totalorder %v290, 111
      %v519 = vsel %vm518, %v515, %v517
      %v520 = vsel %vm518, %v517, %v515
      %vm521 = vmand %vm462, %vm362
      %vm522 = vmand %vm521, %vm364
      %v523 = vsel %vm522, 1, 0
      %v524 = vcvt.s32.f32 %v523
      %v526 = vlaneseq
      %v527 = vshrl.u32 %v526, 7
      %v528 = vsub.s32 0, %v527
      %v529 = vrot.slane %v524, %v528
      %v530 = vlaneseq
      %v531 = vshrl.u32 %v530, 7
      %v532 = vsub.s32 1, %v531
      %v533 = vrot.slane %v524, %v532
      %v536 = vmul.f32 %v519, %v529
      %v537 = vmul.f32 %v520, %v533
      %538 = vst [vmem:[#allocation2 + $0x40] sm:$0xf] %v536
      %539 = vst [vmem:[#allocation2 + $0x48] sm:$0xf] %v537
      %v540 = vld [vmem:[%s3] sm:$0xf]
      %v541 = vld [vmem:[#allocation2] sm:$0xff]
      %v542 = vld [vmem:[#allocation2 + $0x8] sm:$0xff]
      %v543 = vld [vmem:[#allocation2 + $0x10] sm:$0xff]
      %v544 = vld [vmem:[#allocation2 + $0x18] sm:$0xff]
      %v545 = vld [vmem:[#allocation2 + $0x20] sm:$0xff]
      %v546 = vld [vmem:[#allocation2 + $0x28] sm:$0xff]
      %v547 = vld [vmem:[#allocation2 + $0x30] sm:$0xff]
      %v548 = vld [vmem:[#allocation2 + $0x38] sm:$0xff]
      %v549 = vld [vmem:[#allocation2 + $0x40] sm:$0xf]
      %v550 = vld [vmem:[#allocation2 + $0x48] sm:$0xf]
      %v551 = vld [vmem:[%s4] sm:$0xf]
      %553 = vset.pattern.permute.xlu0 0
      %554 = vperm.xlu0 %553, %v551
      %v555 = vpop.permute.xlu0 %554
      %vm557 = vcmask 293888
      %v559 = vsel %vm557, %v540, 0
      %vm561 = vcmask 1043456
      %v563 = vsel %vm561, %v549, 0
      %v566 = vsel %vm561, %v550, 0
      %568 = vmatprep.subr.mxu0 %v542
      %569 = vmatpush1.msra.mxu0 %v541
      %570 = vmatprep.subr.mxu0 %v544
      %571 = vmatpush1.msra.mxu0 %v543
      %572 = vmatprep.subr.mxu0 %v546
      %573 = vmatpush1.msra.mxu0 %v545
      %574 = vmatprep.subr.mxu0 %v548
      %575 = vmatpush1.msra.mxu0 %v547
      %576 = vmatprep.subr.mxu0 %v566
      %577 = vmatpush1.msra.mxu0 %v563
      %578 = vmatprep.subr.mxu0 0.0
      %579 = vmatpush1.msra.mxu0 0.0
      %580 = vmatprep.subr.mxu0 0.0
      %581 = vmatpush1.msra.mxu0 0.0
      %582 = vmatprep.subr.mxu0 0.0
      %583 = vmatpush1.msra.mxu0 0.0
      %584 = vmatprep.subr.mxu0 0.0
      %585 = vmatpush1.msra.mxu0 0.0
      %586 = vmatprep.subr.mxu0 0.0
      %587 = vmatpush1.msra.mxu0 0.0
      %588 = vmatprep.subr.mxu0 0.0
      %589 = vmatpush1.msra.mxu0 0.0
      %590 = vmatprep.subr.mxu0 0.0
      %591 = vmatpush1.msra.mxu0 0.0
      %592 = vmatprep.subr.mxu0 0.0
      %593 = vmatpush1.msra.mxu0 0.0
      %594 = vmatprep.subr.mxu0 0.0
      %595 = vmatpush1.msra.mxu0 0.0
      %596 = vmatprep.subr.mxu0 0.0
      %597 = vmatpush1.msra.mxu0 0.0
      %598 = vmatprep.subr.mxu0 0.0
      %599 = vmatpush1.msra.mxu0 0.0
      %600 = vmatprep.subr.mxu0 0.0
      %601 = vmatpush1.msra.mxu0 0.0
      %602 = vmatprep.subr.mxu0 0.0
      %603 = vmatpush1.msra.mxu0 0.0
      %604 = vmatprep.subr.mxu0 0.0
      %605 = vmatpush1.msra.mxu0 0.0
      %606 = vmatprep.subr.mxu0 0.0
      %607 = vmatpush1.msra.mxu0 0.0
      %608 = vmatprep.subr.mxu0 0.0
      %609 = vmatpush1.msra.mxu0 0.0
      %610 = vmatprep.subr.mxu0 0.0
      %611 = vmatpush1.msra.mxu0 0.0
      %612 = vmatprep.subr.mxu0 0.0
      %613 = vmatpush1.msra.mxu0 0.0
      %614 = vmatprep.subr.mxu0 0.0
      %615 = vmatpush1.msra.mxu0 0.0
      %616 = vmatprep.subr.mxu0 0.0
      %617 = vmatpush1.msra.mxu0 0.0
      %618 = vmatprep.subr.mxu0 0.0
      %619 = vmatpush1.msra.mxu0 0.0
      %620 = vmatprep.subr.mxu0 0.0
      %621 = vmatpush1.msra.mxu0 0.0
      %622 = vmatprep.subr.mxu0 0.0
      %623 = vmatpush1.msra.mxu0 0.0
      %624 = vmatprep.subr.mxu0 0.0
      %625 = vmatpush1.msra.mxu0 0.0
      %626 = vmatprep.subr.mxu0 0.0
      %627 = vmatpush1.msra.mxu0 0.0
      %628 = vmatprep.subr.mxu0 0.0
      %629 = vmatpush1.msra.mxu0 0.0
      %630 = vmatprep.subr.mxu0 0.0
      %631 = vmatpush1.msra.mxu0 0.0
      %632 = vmatprep.mubr.f32.mxu0 0.0
      %633 = vmatmul.mubr.f32.gmra.mrb[0].mxu0 %v559
      %v634 = vpop.f32.mrb[0].mxu0
      %v635 = vadd.f32 %v555, %v634
      %v636 = vpop.f32.mrb[0].mxu0
      %v637 = vadd.f32 %v555, %v636
      %638 = vdwg.mxu0
      %v639 = vmax.f32 %v635, 0.0
      %v640 = vmax.f32 %v637, 0.0
      %641 = vrot.lane.b32.xlu0 %v639, 34
      %v642 = vpop.permute.xlu0 %641
      %643 = vrot.lane.b32.xlu0 %v640, 34
      %v644 = vpop.permute.xlu0 %643
      %vm645 = vcmp.lt.s32.totalorder %v290, 34
      %v646 = vsel %vm645, %v642, %v644
      %v647 = vsel %vm645, %v644, %v642
      %v648 = vadd.s32 %v280, 4294967294
      %vm649 = vcmp.ge.s32.totalorder %v648, 0
      %vm650 = vcmp.lt.s32.totalorder %v648, 16
      %vm651 = vmand %vm649, %vm650
      %v652 = vadd.s32 %v281, 4294967294
      %vm653 = vcmp.ge.s32.totalorder %v652, 0
      %vm654 = vmand %vm651, %vm653
      %vm655 = vcmp.lt.s32.totalorder %v652, 16
      %vm656 = vmand %vm654, %vm655
      %v657 = vsel %vm656, 1, 0
      %v658 = vcvt.s32.f32 %v657
      %v660 = vlaneseq
      %v661 = vshrl.u32 %v660, 7
      %v662 = vsub.s32 0, %v661
      %v663 = vrot.slane %v658, %v662
      %v664 = vlaneseq
      %v665 = vshrl.u32 %v664, 7
      %v666 = vsub.s32 1, %v665
      %v667 = vrot.slane %v658, %v666
      %v670 = vmul.f32 %v647, %v663
      %v671 = vmul.f32 %v646, %v667
      %672 = vst [vmem:[#allocation2] sm:$0xf] %v670
      %673 = vst [vmem:[#allocation2 + $0x8] sm:$0xf] %v671
      %674 = vrot.lane.b32.xlu0 %v639, 32
      %v675 = vpop.permute.xlu0 %674
      %676 = vrot.lane.b32.xlu0 %v640, 32
      %v677 = vpop.permute.xlu0 %676
      %vm678 = vcmp.lt.s32.totalorder %v290, 32
      %v679 = vsel %vm678, %v675, %v677
      %v680 = vsel %vm678, %v677, %v675
      %vm681 = vmand %vm651, %vm327
      %vm682 = vmand %vm681, %vm329
      %v683 = vsel %vm682, 1, 0
      %v684 = vcvt.s32.f32 %v683
      %v686 = vlaneseq
      %v687 = vshrl.u32 %v686, 7
      %v688 = vsub.s32 0, %v687
      %v689 = vrot.slane %v684, %v688
      %v690 = vlaneseq
      %v691 = vshrl.u32 %v690, 7
      %v692 = vsub.s32 1, %v691
      %v693 = vrot.slane %v684, %v692
      %v696 = vmul.f32 %v680, %v689
      %v697 = vmul.f32 %v679, %v693
      %v700 = vrot.slane %v696, 4
      %v701 = vrot.slane %v697, 4
      %704 = vst [vmem:[#allocation2] sm:$0xf0] %v700
      %705 = vst [vmem:[#allocation2 + $0x8] sm:$0xf0] %v701
      %706 = vrot.lane.b32.xlu0 %v639, 30
      %v707 = vpop.permute.xlu0 %706
      %708 = vrot.lane.b32.xlu0 %v640, 30
      %v709 = vpop.permute.xlu0 %708
      %vm710 = vcmp.lt.s32.totalorder %v290, 30
      %v711 = vsel %vm710, %v707, %v709
      %v712 = vsel %vm710, %v709, %v707
      %v713 = vadd.s32 %v281, 2
      %vm714 = vcmp.ge.s32.totalorder %v713, 0
      %vm715 = vmand %vm651, %vm714
      %vm716 = vcmp.lt.s32.totalorder %v713, 16
      %vm717 = vmand %vm715, %vm716
      %v718 = vsel %vm717, 1, 0
      %v719 = vcvt.s32.f32 %v718
      %v721 = vlaneseq
      %v722 = vshrl.u32 %v721, 7
      %v723 = vsub.s32 0, %v722
      %v724 = vrot.slane %v719, %v723
      %v725 = vlaneseq
      %v726 = vshrl.u32 %v725, 7
      %v727 = vsub.s32 1, %v726
      %v728 = vrot.slane %v719, %v727
      %v731 = vmul.f32 %v712, %v724
      %v732 = vmul.f32 %v711, %v728
      %733 = vst [vmem:[#allocation2 + $0x10] sm:$0xf] %v731
      %734 = vst [vmem:[#allocation2 + $0x18] sm:$0xf] %v732
      %735 = vrot.lane.b32.xlu0 %v639, 2
      %v736 = vpop.permute.xlu0 %735
      %737 = vrot.lane.b32.xlu0 %v640, 2
      %v738 = vpop.permute.xlu0 %737
      %vm739 = vcmp.lt.s32.totalorder %v290, 2
      %v740 = vsel %vm739, %v736, %v738
      %v741 = vsel %vm739, %v738, %v736
      %vm742 = vmand %vm392, %vm653
      %vm743 = vmand %vm742, %vm655
      %v744 = vsel %vm743, 1, 0
      %v745 = vcvt.s32.f32 %v744
      %v747 = vlaneseq
      %v748 = vshrl.u32 %v747, 7
      %v749 = vsub.s32 0, %v748
      %v750 = vrot.slane %v745, %v749
      %v751 = vlaneseq
      %v752 = vshrl.u32 %v751, 7
      %v753 = vsub.s32 1, %v752
      %v754 = vrot.slane %v745, %v753
      %v757 = vmul.f32 %v741, %v750
      %v758 = vmul.f32 %v740, %v754
      %v761 = vrot.slane %v757, 4
      %v762 = vrot.slane %v758, 4
      %765 = vst [vmem:[#allocation2 + $0x10] sm:$0xf0] %v761
      %766 = vst [vmem:[#allocation2 + $0x18] sm:$0xf0] %v762
      %767 = vst [vmem:[#allocation2 + $0x20] sm:$0xf] %v639
      %768 = vst [vmem:[#allocation2 + $0x28] sm:$0xf] %v640
      %769 = vrot.lane.b32.xlu0 %v639, 126
      %v770 = vpop.permute.xlu0 %769
      %771 = vrot.lane.b32.xlu0 %v640, 126
      %v772 = vpop.permute.xlu0 %771
      %vm773 = vcmp.lt.s32.totalorder %v290, 126
      %v774 = vsel %vm773, %v770, %v772
      %v775 = vsel %vm773, %v772, %v770
      %vm776 = vmand %vm392, %vm714
      %vm777 = vmand %vm776, %vm716
      %v778 = vsel %vm777, 1, 0
      %v779 = vcvt.s32.f32 %v778
      %v781 = vlaneseq
      %v782 = vshrl.u32 %v781, 7
      %v783 = vsub.s32 0, %v782
      %v784 = vrot.slane %v779, %v783
      %v785 = vlaneseq
      %v786 = vshrl.u32 %v785, 7
      %v787 = vsub.s32 1, %v786
      %v788 = vrot.slane %v779, %v787
      %v791 = vmul.f32 %v774, %v784
      %v792 = vmul.f32 %v775, %v788
      %v795 = vrot.slane %v791, 4
      %v796 = vrot.slane %v792, 4
      %799 = vst [vmem:[#allocation2 + $0x20] sm:$0xf0] %v795
      %800 = vst [vmem:[#allocation2 + $0x28] sm:$0xf0] %v796
      %801 = vrot.lane.b32.xlu0 %v639, 98
      %v802 = vpop.permute.xlu0 %801
      %803 = vrot.lane.b32.xlu0 %v640, 98
      %v804 = vpop.permute.xlu0 %803
      %vm805 = vcmp.lt.s32.totalorder %v290, 98
      %v806 = vsel %vm805, %v802, %v804
      %v807 = vsel %vm805, %v804, %v802
      %v808 = vadd.s32 %v280, 2
      %vm809 = vcmp.ge.s32.totalorder %v808, 0
      %vm810 = vcmp.lt.s32.totalorder %v808, 16
      %vm811 = vmand %vm809, %vm810
      %vm812 = vmand %vm811, %vm653
      %vm813 = vmand %vm812, %vm655
      %v814 = vsel %vm813, 1, 0
      %v815 = vcvt.s32.f32 %v814
      %v817 = vlaneseq
      %v818 = vshrl.u32 %v817, 7
      %v819 = vsub.s32 0, %v818
      %v820 = vrot.slane %v815, %v819
      %v821 = vlaneseq
      %v822 = vshrl.u32 %v821, 7
      %v823 = vsub.s32 1, %v822
      %v824 = vrot.slane %v815, %v823
      %v827 = vmul.f32 %v806, %v820
      %v828 = vmul.f32 %v807, %v824
      %829 = vst [vmem:[#allocation2 + $0x30] sm:$0xf] %v827
      %830 = vst [vmem:[#allocation2 + $0x38] sm:$0xf] %v828
      %831 = vrot.lane.b32.xlu0 %v639, 96
      %v832 = vpop.permute.xlu0 %831
      %833 = vrot.lane.b32.xlu0 %v640, 96
      %v834 = vpop.permute.xlu0 %833
      %vm835 = vcmp.lt.s32.totalorder %v290, 96
      %v836 = vsel %vm835, %v832, %v834
      %v837 = vsel %vm835, %v834, %v832
      %vm838 = vmand %vm811, %vm327
      %vm839 = vmand %vm838, %vm329
      %v840 = vsel %vm839, 1, 0
      %v841 = vcvt.s32.f32 %v840
      %v843 = vlaneseq
      %v844 = vshrl.u32 %v843, 7
      %v845 = vsub.s32 0, %v844
      %v846 = vrot.slane %v841, %v845
      %v847 = vlaneseq
      %v848 = vshrl.u32 %v847, 7
      %v849 = vsub.s32 1, %v848
      %v850 = vrot.slane %v841, %v849
      %v853 = vmul.f32 %v836, %v846
      %v854 = vmul.f32 %v837, %v850
      %v857 = vrot.slane %v853, 4
      %v858 = vrot.slane %v854, 4
      %861 = vst [vmem:[#allocation2 + $0x30] sm:$0xf0] %v857
      %862 = vst [vmem:[#allocation2 + $0x38] sm:$0xf0] %v858
      %863 = vrot.lane.b32.xlu0 %v639, 94
      %v864 = vpop.permute.xlu0 %863
      %865 = vrot.lane.b32.xlu0 %v640, 94
      %v866 = vpop.permute.xlu0 %865
      %vm867 = vcmp.lt.s32.totalorder %v290, 94
      %v868 = vsel %vm867, %v864, %v866
      %v869 = vsel %vm867, %v866, %v864
      %vm870 = vmand %vm811, %vm714
      %vm871 = vmand %vm870, %vm716
      %v872 = vsel %vm871, 1, 0
      %v873 = vcvt.s32.f32 %v872
      %v875 = vlaneseq
      %v876 = vshrl.u32 %v875, 7
      %v877 = vsub.s32 0, %v876
      %v878 = vrot.slane %v873, %v877
      %v879 = vlaneseq
      %v880 = vshrl.u32 %v879, 7
      %v881 = vsub.s32 1, %v880
      %v882 = vrot.slane %v873, %v881
      %v885 = vmul.f32 %v868, %v878
      %v886 = vmul.f32 %v869, %v882
      %887 = vst [vmem:[#allocation2 + $0x40] sm:$0xf] %v885
      %888 = vst [vmem:[#allocation2 + $0x48] sm:$0xf] %v886
      %v889 = vld [vmem:[%s5] sm:$0xf]
      %v890 = vld [vmem:[#allocation2] sm:$0xff]
      %v891 = vld [vmem:[#allocation2 + $0x8] sm:$0xff]
      %v892 = vld [vmem:[#allocation2 + $0x10] sm:$0xff]
      %v893 = vld [vmem:[#allocation2 + $0x18] sm:$0xff]
      %v894 = vld [vmem:[#allocation2 + $0x20] sm:$0xff]
      %v895 = vld [vmem:[#allocation2 + $0x28] sm:$0xff]
      %v896 = vld [vmem:[#allocation2 + $0x30] sm:$0xff]
      %v897 = vld [vmem:[#allocation2 + $0x38] sm:$0xff]
      %v898 = vld [vmem:[#allocation2 + $0x40] sm:$0xf]
      %v899 = vld [vmem:[#allocation2 + $0x48] sm:$0xf]
      %v900 = vld [vmem:[%s6] sm:$0xf]
      %902 = vset.pattern.permute.xlu0 0
      %903 = vperm.xlu0 %902, %v900
      %v904 = vpop.permute.xlu0 %903
      %v907 = vsel %vm557, %v889, 0
      %v910 = vsel %vm561, %v898, 0
      %v913 = vsel %vm561, %v899, 0
      %915 = vmatprep.subr.mxu0 %v891
      %916 = vmatpush1.msra.mxu0 %v890
      %917 = vmatprep.subr.mxu0 %v893
      %918 = vmatpush1.msra.mxu0 %v892
      %919 = vmatprep.subr.mxu0 %v895
      %920 = vmatpush1.msra.mxu0 %v894
      %921 = vmatprep.subr.mxu0 %v897
      %922 = vmatpush1.msra.mxu0 %v896
      %923 = vmatprep.subr.mxu0 %v913
      %924 = vmatpush1.msra.mxu0 %v910
      %925 = vmatprep.subr.mxu0 0.0
      %926 = vmatpush1.msra.mxu0 0.0
      %927 = vmatprep.subr.mxu0 0.0
      %928 = vmatpush1.msra.mxu0 0.0
      %929 = vmatprep.subr.mxu0 0.0
      %930 = vmatpush1.msra.mxu0 0.0
      %931 = vmatprep.subr.mxu0 0.0
      %932 = vmatpush1.msra.mxu0 0.0
      %933 = vmatprep.subr.mxu0 0.0
      %934 = vmatpush1.msra.mxu0 0.0
      %935 = vmatprep.subr.mxu0 0.0
      %936 = vmatpush1.msra.mxu0 0.0
      %937 = vmatprep.subr.mxu0 0.0
      %938 = vmatpush1.msra.mxu0 0.0
      %939 = vmatprep.subr.mxu0 0.0
      %940 = vmatpush1.msra.mxu0 0.0
      %941 = vmatprep.subr.mxu0 0.0
      %942 = vmatpush1.msra.mxu0 0.0
      %943 = vmatprep.subr.mxu0 0.0
      %944 = vmatpush1.msra.mxu0 0.0
      %945 = vmatprep.subr.mxu0 0.0
      %946 = vmatpush1.msra.mxu0 0.0
      %947 = vmatprep.subr.mxu0 0.0
      %948 = vmatpush1.msra.mxu0 0.0
      %949 = vmatprep.subr.mxu0 0.0
      %950 = vmatpush1.msra.mxu0 0.0
      %951 = vmatprep.subr.mxu0 0.0
      %952 = vmatpush1.msra.mxu0 0.0
      %953 = vmatprep.subr.mxu0 0.0
      %954 = vmatpush1.msra.mxu0 0.0
      %955 = vmatprep.subr.mxu0 0.0
      %956 = vmatpush1.msra.mxu0 0.0
      %957 = vmatprep.subr.mxu0 0.0
      %958 = vmatpush1.msra.mxu0 0.0
      %959 = vmatprep.subr.mxu0 0.0
      %960 = vmatpush1.msra.mxu0 0.0
      %961 = vmatprep.subr.mxu0 0.0
      %962 = vmatpush1.msra.mxu0 0.0
      %963 = vmatprep.subr.mxu0 0.0
      %964 = vmatpush1.msra.mxu0 0.0
      %965 = vmatprep.subr.mxu0 0.0
      %966 = vmatpush1.msra.mxu0 0.0
      %967 = vmatprep.subr.mxu0 0.0
      %968 = vmatpush1.msra.mxu0 0.0
      %969 = vmatprep.subr.mxu0 0.0
      %970 = vmatpush1.msra.mxu0 0.0
      %971 = vmatprep.subr.mxu0 0.0
      %972 = vmatpush1.msra.mxu0 0.0
      %973 = vmatprep.subr.mxu0 0.0
      %974 = vmatpush1.msra.mxu0 0.0
      %975 = vmatprep.subr.mxu0 0.0
      %976 = vmatpush1.msra.mxu0 0.0
      %977 = vmatprep.subr.mxu0 0.0
      %978 = vmatpush1.msra.mxu0 0.0
      %979 = vmatprep.mubr.f32.mxu0 0.0
      %980 = vmatmul.mubr.f32.gmra.mrb[0].mxu0 %v907
      %v981 = vpop.f32.mrb[0].mxu0
      %v982 = vadd.f32 %v904, %v981
      %v983 = vpop.f32.mrb[0].mxu0
      %v984 = vadd.f32 %v904, %v983
      %985 = vdwg.mxu0
      %v986 = vadd.f32 %v982, %v279
      %v987 = vadd.f32 %v984, %v283
      %v990 = vcombine.low %v986, %v987
      %992 = vst [vmem:[%s278] sm:$0xff] %v990
      %p993 = scmp.lt.s32.totalorder %s18, 1
      %s994 = scalar_select %p993, %s18, 1
      %s995 = smul.addr %s994, 2
      %s996 = smul.addr %s995, 4
      %s997 = scalar_lea.vmem %s7, %s996
      // Predicated region
      $region49: #{resnet_block_bn.1} parent=47 // pred_check
        %p998 = pneg %p188
      $region50: #{resnet_block_bn.1} parent=47 // pred_check_branch
        %1000 = sbr.rel (%p998) target = $region52
      $region51: #{resnet_block_bn.1} parent=47 // pred_region
        _
      $region52: #{resnet_block_bn.1} parent=47 // pred_fallthru
        _
    $region48: #{resnet_block_bn.1} parent=5 // pred_fallthru
      _
    %p1001 = scmp.le.s32.totalorder 2, %s13
    // Predicated region
    $region53: #{resnet_block_bn.1} parent=5 // pred_check
      %p1002 = pneg %p1001
    $region54: #{resnet_block_bn.1} parent=5 // pred_check_branch
      %1004 = sbr.rel (%p1002) target = $region56
    $region55: #{resnet_block_bn.1} parent=5 // pred_region
      %s1005 = ssub.s32 %s13, 2
      // Predicated region
      $region57: #{resnet_block_bn.1} parent=55 // pred_check
        %p1006 = pneg %p194
      $region58: #{resnet_block_bn.1} parent=55 // pred_check_branch
        %1008 = sbr.rel (%p1006) target = $region60
      $region59: #{resnet_block_bn.1} parent=55 // pred_region
        %p1009 = scmp.lt.s32.totalorder %s19, 1
        %s1010 = scalar_select %p1009, %s19, 1
        %s1011 = smul.addr %s1010, 2
        %s1012 = smul.addr %s1011, 4
        %s1013 = scalar_lea.vmem %s7, %s1012
      $region60: #{resnet_block_bn.1} parent=55 // pred_fallthru
        _
    $region56: #{resnet_block_bn.1} parent=5 // pred_fallthru
      _
  $region6: #{resnet_block_bn.1} parent=0 // loop_footer
    %s17 = sadd.s32 1, %s13
  $region7: #{resnet_block_bn.1} parent=0 // loop_footer_branch
    %12 = sbr.rel target = $region3
  $region8: #{resnet_block_bn.1} parent=0 // loop_exit
    _

</llo_original>
